<compile_context>
chip_gen: v6e
topology: v6e:2x2x1
jax: 0.10.0
libtpu: 0.0.40
codegen_flags: <defaults>
</compile_context>

<pallas_src>
import jax
import jax.numpy as jnp
from jax import lax
from jax.experimental import pallas as pl
from jax.experimental.pallas import tpu as pltpu

EPS = 1e-5


# --------------------------- Kernel 1: x statistics --------------------------
def bn_stats_kernel(x_ref, stats_ref):
  # x_ref: (1, H, W, C);  stats_ref: (2, C) f32, resident across the grid.
  n = pl.program_id(0)
  x = x_ref[...].astype(jnp.float32)
  C = x.shape[-1]
  xf = x.reshape(-1, C)
  s = jnp.sum(xf, axis=0, keepdims=True)          # (1, C)
  sq = jnp.sum(xf * xf, axis=0, keepdims=True)    # (1, C)

  @pl.when(n == 0)
  def _():
    stats_ref[...] = jnp.zeros_like(stats_ref)

  stats_ref[...] += jnp.concatenate([s, sq], axis=0)


# ----------------- Kernel 2: BN1 + ReLU + conv1x1 (+ y stats) ----------------
def bn1_conv1_kernel(x_ref, scale1_ref, shift1_ref, w1_ref, y_ref, ystats_ref):
  # x_ref: (1, H, W, Cin); scale/shift: (1, Cin) f32; w1_ref: (Cin, Cmid) bf16
  # y_ref: (1, H, W, Cmid) bf16; ystats_ref: (2, Cmid) f32 (grid accumulator)
  n = pl.program_id(0)
  x = x_ref[...].astype(jnp.float32)
  Cin = x.shape[-1]
  xf = x.reshape(-1, Cin)

  # BN1 folded into per-channel scale/shift, then ReLU (f32 VPU work).
  h = jnp.maximum(xf * scale1_ref[...] + shift1_ref[...], 0.0)

  # 1x1 conv = matmul on the MXU, bf16 operands, f32 accumulation.
  y = jnp.dot(h.astype(jnp.bfloat16), w1_ref[...],
              preferred_element_type=jnp.float32)         # (HW, Cmid) f32

  # One-pass partial statistics of y (before the bf16 rounding for storage).
  s = jnp.sum(y, axis=0, keepdims=True)
  sq = jnp.sum(y * y, axis=0, keepdims=True)

  @pl.when(n == 0)
  def _():
    ystats_ref[...] = jnp.zeros_like(ystats_ref)

  ystats_ref[...] += jnp.concatenate([s, sq], axis=0)
  y_ref[...] = y.reshape(y_ref.shape).astype(y_ref.dtype)


# --------------------- Kernel 3: BN2 + ReLU + conv3x3 ------------------------
def bn2_conv3_kernel(y_ref, scale2_ref, shift2_ref, w2_ref, o_ref):
  # y_ref: (1, H, W, Cmid) bf16; scale/shift: (1, Cmid) f32
  # w2_ref: (3, 3*Cmid, G) bf16 with layout [ky, kx*Cmid + c, g]
  # o_ref: (1, H, W, G) f32  -- only the NEW channels (concat done in wrapper).
  yb = y_ref[...]
  _, H, W, C = yb.shape
  G = o_ref.shape[-1]

  a = jnp.maximum(yb.astype(jnp.float32).reshape(-1, C) * scale2_ref[...]
                  + shift2_ref[...], 0.0)
  a = a.reshape(H, W, C).astype(jnp.bfloat16)

  # Stack the three kx-shifted copies along the channel axis (small tensor).
  zc = jnp.zeros((H, 1, C), jnp.bfloat16)
  aw = jnp.concatenate([zc, a, zc], axis=1)                      # (H, W+2, C)
  z = jnp.concatenate(
      [aw[:, 0:W, :], aw[:, 1:W + 1, :], aw[:, 2:W + 2, :]], axis=-1)  # (H,W,3C)

  # Pad along H (leading dim -> ky taps are cheap, tile-granular slices).
  zr = jnp.zeros((1, W, 3 * C), jnp.bfloat16)
  zp = jnp.concatenate([zr, z, zr], axis=0)                      # (H+2, W, 3C)

  acc = jnp.zeros((H * W, G), jnp.float32)
  for ky in range(3):                                            # 3 big matmuls
    tap = zp[ky:ky + H].reshape(H * W, 3 * C)
    acc = acc + jnp.dot(tap, w2_ref[ky], preferred_element_type=jnp.float32)

  o_ref[...] = acc.reshape(1, H, W, G).astype(o_ref.dtype)


# --------------------------------- Wrapper -----------------------------------
def dense_block_pallas(x_nchw, params):
  """x_nchw: (N, Cin, H, W) float32.  Returns (N, Cin+G, H, W) float32."""
  g1, b1, w1, g2, b2, w2 = params
  N, Cin, H, W = x_nchw.shape
  Cmid = w1.shape[1]
  G = w2.shape[2]
  NHW = N * H * W

  x_nhwc = jnp.transpose(x_nchw, (0, 2, 3, 1))      # NCHW -> NHWC

  # ---- pass 1: BN1 batch statistics ----
  stats1 = pl.pallas_call(
      bn_stats_kernel,
      out_shape=jax.ShapeDtypeStruct((2, Cin), jnp.float32),
      grid=(N,),
      in_specs=[pl.BlockSpec((1, H, W, Cin), lambda n: (n, 0, 0, 0))],
      out_specs=pl.BlockSpec((2, Cin), lambda n: (0, 0)),
      compiler_params=pltpu.CompilerParams(dimension_semantics=("arbitrary",)),
  )(x_nhwc)
  mean1 = stats1[0] / NHW
  var1 = stats1[1] / NHW - mean1 * mean1
  inv1 = g1[0] * lax.rsqrt(var1 + EPS)
  scale1 = inv1.reshape(1, Cin)
  shift1 = (b1[0] - mean1 * inv1).reshape(1, Cin)

  w1_bf = w1.astype(jnp.bfloat16)

  # ---- pass 2: BN1-normalize + ReLU + conv1x1, fused partial stats of y ----
  y_bf, ystats = pl.pallas_call(
      bn1_conv1_kernel,
      out_shape=(jax.ShapeDtypeStruct((N, H, W, Cmid), jnp.bfloat16),
                 jax.ShapeDtypeStruct((2, Cmid), jnp.float32)),
      grid=(N,),
      in_specs=[pl.BlockSpec((1, H, W, Cin), lambda n: (n, 0, 0, 0)),
                pl.BlockSpec((1, Cin), lambda n: (0, 0)),
                pl.BlockSpec((1, Cin), lambda n: (0, 0)),
                pl.BlockSpec((Cin, Cmid), lambda n: (0, 0))],
      out_specs=(pl.BlockSpec((1, H, W, Cmid), lambda n: (n, 0, 0, 0)),
                 pl.BlockSpec((2, Cmid), lambda n: (0, 0))),
      compiler_params=pltpu.CompilerParams(dimension_semantics=("arbitrary",)),
  )(x_nhwc, scale1, shift1, w1_bf)

  mean2 = ystats[0] / NHW
  var2 = ystats[1] / NHW - mean2 * mean2
  inv2 = g2[0] * lax.rsqrt(var2 + EPS)
  scale2 = inv2.reshape(1, Cmid)
  shift2 = (b2[0] - mean2 * inv2).reshape(1, Cmid)

  # conv3x3 weight rearranged to (3, 3*Cmid, G): [ky, kx*Cmid + c, g].
  w2_stk = w2.reshape(3, 3 * Cmid, G).astype(jnp.bfloat16)

  # ---- pass 3: BN2-normalize + ReLU + conv3x3 (new channels only) ----
  out_new = pl.pallas_call(
      bn2_conv3_kernel,
      out_shape=jax.ShapeDtypeStruct((N, H, W, G), jnp.float32),
      grid=(N,),
      in_specs=[pl.BlockSpec((1, H, W, Cmid), lambda n: (n, 0, 0, 0)),
                pl.BlockSpec((1, Cmid), lambda n: (0, 0)),
                pl.BlockSpec((1, Cmid), lambda n: (0, 0)),
                pl.BlockSpec((3, 3 * Cmid, G), lambda n: (0, 0, 0))],
      out_specs=pl.BlockSpec((1, H, W, G), lambda n: (n, 0, 0, 0)),
      compiler_params=pltpu.CompilerParams(dimension_semantics=("parallel",)),
  )(y_bf, scale2, shift2, w2_stk)

  out_nchw = jnp.transpose(out_new, (0, 3, 1, 2))   # NHWC -> NCHW
  return jnp.concatenate([x_nchw, out_nchw], axis=1)


# ---------------- pure-JAX reference (all-f32, for correctness check) --------
def dense_block_ref(x_nchw, params):
  g1, b1, w1, g2, b2, w2 = params
  Cmid = w1.shape[1]
  G = w2.shape[2]

  def bn(x, g, b):
    mean = jnp.mean(x, axis=(0, 2, 3), keepdims=True)
    var = jnp.mean((x - mean) ** 2, axis=(0, 2, 3), keepdims=True)
    return ((x - mean) * lax.rsqrt(var + EPS) * g.reshape(1, -1, 1, 1)
            + b.reshape(1, -1, 1, 1))

  dn = ('NCHW', 'OIHW', 'NCHW')
  h = jax.nn.relu(bn(x_nchw, g1, b1))
  w1_oihw = w1.T[:, :, None, None]                          # (Cmid, Cin, 1, 1)
  h = lax.conv_general_dilated(h, w1_oihw, (1, 1), 'SAME', dimension_numbers=dn)
  h = jax.nn.relu(bn(h, g2, b2))
  w2_oihw = jnp.transpose(w2.reshape(3, 3, Cmid, G), (3, 2, 0, 1))  # (G,Cmid,3,3)
  h = lax.conv_general_dilated(h, w2_oihw, (1, 1), 'SAME', dimension_numbers=dn)
  return jnp.concatenate([x_nchw, h], axis=1)


def init_params(key, in_channels, growth_rate, bn_size=4):
  cmid = growth_rate * bn_size
  k1, k2, k3, k4 = jax.random.split(key, 4)
  g1 = (1.0 + 0.1 * jax.random.normal(k1, (1, in_channels))).astype(jnp.float32)
  b1 = (0.05 * jax.random.normal(k2, (1, in_channels))).astype(jnp.float32)
  g2 = (1.0 + 0.1 * jax.random.normal(k3, (1, cmid))).astype(jnp.float32)
  b2 = (0.05 * jax.random.normal(k4, (1, cmid))).astype(jnp.float32)
  kw1, kw2 = jax.random.split(jax.random.fold_in(key, 7))
  # conv1x1 weight as (Cin, Cmid)  [== PyTorch weight[o,i,0,0].T]
  w1 = (0.2 * jax.random.normal(kw1, (in_channels, cmid))).astype(jnp.float32)
  # conv3x3 weight as (9, Cmid, G), tap index = ky*3 + kx  [== weight[o,i,ky,kx]]
  w2 = (0.2 * jax.random.normal(kw2, (9, cmid, growth_rate))).astype(jnp.float32)
  return (g1, b1, w1, g2, b2, w2)


if __name__ == "__main__":
  N, Cin, H, W = 2, 4, 16, 16
  growth_rate, bn_size = 4, 4

  key = jax.random.PRNGKey(0)
  kx, kp = jax.random.split(key)
  x = jax.random.normal(kx, (N, Cin, H, W), dtype=jnp.float32)
  params = init_params(kp, Cin, growth_rate, bn_size)

  fwd = jax.jit(dense_block_pallas)
  out = jax.block_until_ready(fwd(x, params))
  ref = jax.block_until_ready(dense_block_ref(x, params))

  assert out.shape == (N, Cin + growth_rate, H, W), out.shape
  # bf16 MXU operands (f32 accumulation) vs the all-f32 reference -> use a
  # mixed-precision tolerance.
  err = float(jnp.max(jnp.abs(out - ref)))
  assert jnp.allclose(out, ref, atol=5e-2, rtol=5e-2), err
  print("KERNEL_OK")
</pallas_src>

<mosaic_0001>
module attributes {stable_mosaic.version = 11 : i64} {
  func.func @bn_stats_kernel(%arg0: i32, %arg1: memref<1x16x16x4xf32, #tpu.memory_space<vmem>>, %arg2: memref<2x4xf32, #tpu.memory_space<vmem>>) attributes {dimension_semantics = [#tpu.dimension_semantics<arbitrary>], iteration_bounds = array<i64: 2>, scalar_prefetch = 0 : i64, scratch_operands = 0 : i64, tpu.core_type = #tpu.core_type<tc>, window_params = [{transform_indices = @transform_0, window_bounds = array<i64: 1, 16, 16, 4>}, {pipeline_mode = #tpu.pipeline_mode<synchronous>, transform_indices = @transform_1, window_bounds = array<i64: 2, 4>}]} {
    %c0 = arith.constant 0 : index
    %c0_0 = arith.constant 0 : index
    %c0_1 = arith.constant 0 : index
    %c0_2 = arith.constant 0 : index
    %0 = vector.load %arg1[%c0, %c0_0, %c0_1, %c0_2] : memref<1x16x16x4xf32, #tpu.memory_space<vmem>>, vector<1x16x16x4xf32>
    %1 = vector.shape_cast %0 : vector<1x16x16x4xf32> to vector<256x4xf32>
    %cst = arith.constant dense<0.000000e+00> : vector<4xf32>
    %2 = vector.multi_reduction <add>, %1, %cst [0] : vector<256x4xf32> to vector<4xf32>
    %3 = vector.shape_cast %2 : vector<4xf32> to vector<1x4xf32>
    %4 = arith.mulf %1, %1 : vector<256x4xf32>
    %cst_3 = arith.constant dense<0.000000e+00> : vector<4xf32>
    %5 = vector.multi_reduction <add>, %4, %cst_3 [0] : vector<256x4xf32> to vector<4xf32>
    %6 = vector.shape_cast %5 : vector<4xf32> to vector<1x4xf32>
    %c0_i32 = arith.constant 0 : i32
    %7 = arith.cmpi eq, %arg0, %c0_i32 : i32
    %8 = arith.extui %7 : i1 to i32
    %c0_i32_4 = arith.constant 0 : i32
    %9 = arith.cmpi ne, %8, %c0_i32_4 : i32
    scf.if %9 {
      %cst_9 = arith.constant 0.000000e+00 : f32
      %14 = vector.broadcast %cst_9 : f32 to vector<2x4xf32>
      %c0_10 = arith.constant 0 : index
      %c0_11 = arith.constant 0 : index
      %15 = vector.load %arg2[%c0_10, %c0_11] : memref<2x4xf32, #tpu.memory_space<vmem>>, vector<2x4xf32>
      tpu.vector_store %arg2[%c0_10, %c0_11], %14 {strides = array<i32>} : memref<2x4xf32, #tpu.memory_space<vmem>>, vector<2x4xf32>,
    } else {
    }
    %c0_5 = arith.constant 0 : index
    %c0_6 = arith.constant 0 : index
    %10 = vector.load %arg2[%c0_5, %c0_6] : memref<2x4xf32, #tpu.memory_space<vmem>>, vector<2x4xf32>
    %11 = tpu.concatenate %3, %6 in 0 : vector<1x4xf32>, vector<1x4xf32> -> vector<2x4xf32>
    %12 = arith.addf %10, %11 : vector<2x4xf32>
    %c0_7 = arith.constant 0 : index
    %c0_8 = arith.constant 0 : index
    %13 = vector.load %arg2[%c0_7, %c0_8] : memref<2x4xf32, #tpu.memory_space<vmem>>, vector<2x4xf32>
    tpu.vector_store %arg2[%c0_7, %c0_8], %12 {strides = array<i32>} : memref<2x4xf32, #tpu.memory_space<vmem>>, vector<2x4xf32>,
    return
  }
  func.func @transform_0(%arg0: i32) -> (i32, i32, i32, i32) {
    %c0_i32 = arith.constant 0 : i32
    %c0_i32_0 = arith.constant 0 : i32
    %c0_i32_1 = arith.constant 0 : i32
    %c0_i32_2 = arith.constant 0 : i32
    return %arg0, %c0_i32, %c0_i32_0, %c0_i32_1 : i32, i32, i32, i32
  }
  func.func @transform_1(%arg0: i32) -> (i32, i32) {
    %c0_i32 = arith.constant 0 : i32
    %c0_i32_0 = arith.constant 0 : i32
    %c0_i32_1 = arith.constant 0 : i32
    return %c0_i32, %c0_i32_0 : i32, i32
  }
}

module attributes {stable_mosaic.version = 11 : i64} {
  func.func @bn1_conv1_kernel(%arg0: i32, %arg1: memref<1x16x16x4xf32, #tpu.memory_space<vmem>>, %arg2: memref<1x4xf32, #tpu.memory_space<vmem>>, %arg3: memref<1x4xf32, #tpu.memory_space<vmem>>, %arg4: memref<4x16xbf16, #tpu.memory_space<vmem>>, %arg5: memref<1x16x16x16xbf16, #tpu.memory_space<vmem>>, %arg6: memref<2x16xf32, #tpu.memory_space<vmem>>) attributes {dimension_semantics = [#tpu.dimension_semantics<arbitrary>], iteration_bounds = array<i64: 2>, scalar_prefetch = 0 : i64, scratch_operands = 0 : i64, tpu.core_type = #tpu.core_type<tc>, window_params = [{transform_indices = @transform_0, window_bounds = array<i64: 1, 16, 16, 4>}, {pipeline_mode = #tpu.pipeline_mode<synchronous>, transform_indices = @transform_1, window_bounds = array<i64: 1, 4>}, {pipeline_mode = #tpu.pipeline_mode<synchronous>, transform_indices = @transform_2, window_bounds = array<i64: 1, 4>}, {pipeline_mode = #tpu.pipeline_mode<synchronous>, transform_indices = @transform_3, window_bounds = array<i64: 4, 16>}, {transform_indices = @transform_4, window_bounds = array<i64: 1, 16, 16, 16>}, {pipeline_mode = #tpu.pipeline_mode<synchronous>, transform_indices = @transform_5, window_bounds = array<i64: 2, 16>}]} {
    %c0 = arith.constant 0 : index
    %c0_0 = arith.constant 0 : index
    %c0_1 = arith.constant 0 : index
    %c0_2 = arith.constant 0 : index
    %0 = vector.load %arg1[%c0, %c0_0, %c0_1, %c0_2] : memref<1x16x16x4xf32, #tpu.memory_space<vmem>>, vector<1x16x16x4xf32>
    %1 = vector.shape_cast %0 : vector<1x16x16x4xf32> to vector<256x4xf32>
    %c0_3 = arith.constant 0 : index
    %c0_4 = arith.constant 0 : index
    %2 = vector.load %arg2[%c0_3, %c0_4] : memref<1x4xf32, #tpu.memory_space<vmem>>, vector<1x4xf32>
    %3 = vector.broadcast %2 : vector<1x4xf32> to vector<256x4xf32>
    %4 = arith.mulf %1, %3 : vector<256x4xf32>
    %c0_5 = arith.constant 0 : index
    %c0_6 = arith.constant 0 : index
    %5 = vector.load %arg3[%c0_5, %c0_6] : memref<1x4xf32, #tpu.memory_space<vmem>>, vector<1x4xf32>
    %6 = vector.broadcast %5 : vector<1x4xf32> to vector<256x4xf32>
    %7 = arith.addf %4, %6 : vector<256x4xf32>
    %cst = arith.constant 0.000000e+00 : f32
    %8 = vector.broadcast %cst : f32 to vector<256x4xf32>
    %9 = arith.maximumf %7, %8 : vector<256x4xf32>
    %10 = arith.truncf %9 : vector<256x4xf32> to vector<256x4xbf16>
    %c0_7 = arith.constant 0 : index
    %c0_8 = arith.constant 0 : index
    %11 = vector.load %arg4[%c0_7, %c0_8] : memref<4x16xbf16, #tpu.memory_space<vmem>>, vector<4x16xbf16>
    %cst_9 = arith.constant dense<0.000000e+00> : vector<256x16xf32>
    %12 = tpu.matmul %10, %11, %cst_9 {dimension_numbers = #tpu.dot_dimension_numbers<[1], [0], [0], [1], [0, 0, 1, 1], [], []>} : vector<256x4xbf16>, vector<4x16xbf16>, vector<256x16xf32> -> vector<256x16xf32>
    %cst_10 = arith.constant dense<0.000000e+00> : vector<16xf32>
    %13 = vector.multi_reduction <add>, %12, %cst_10 [0] : vector<256x16xf32> to vector<16xf32>
    %14 = vector.shape_cast %13 : vector<16xf32> to vector<1x16xf32>
    %15 = arith.mulf %12, %12 : vector<256x16xf32>
    %cst_11 = arith.constant dense<0.000000e+00> : vector<16xf32>
    %16 = vector.multi_reduction <add>, %15, %cst_11 [0] : vector<256x16xf32> to vector<16xf32>
    %17 = vector.shape_cast %16 : vector<16xf32> to vector<1x16xf32>
    %c0_i32 = arith.constant 0 : i32
    %18 = arith.cmpi eq, %arg0, %c0_i32 : i32
    %19 = arith.extui %18 : i1 to i32
    %c0_i32_12 = arith.constant 0 : i32
    %20 = arith.cmpi ne, %19, %c0_i32_12 : i32
    scf.if %20 {
      %cst_21 = arith.constant 0.000000e+00 : f32
      %28 = vector.broadcast %cst_21 : f32 to vector<2x16xf32>
      %c0_22 = arith.constant 0 : index
      %c0_23 = arith.constant 0 : index
      %29 = vector.load %arg6[%c0_22, %c0_23] : memref<2x16xf32, #tpu.memory_space<vmem>>, vector<2x16xf32>
      tpu.vector_store %arg6[%c0_22, %c0_23], %28 {strides = array<i32>} : memref<2x16xf32, #tpu.memory_space<vmem>>, vector<2x16xf32>,
    } else {
    }
    %c0_13 = arith.constant 0 : index
    %c0_14 = arith.constant 0 : index
    %21 = vector.load %arg6[%c0_13, %c0_14] : memref<2x16xf32, #tpu.memory_space<vmem>>, vector<2x16xf32>
    %22 = tpu.concatenate %14, %17 in 0 : vector<1x16xf32>, vector<1x16xf32> -> vector<2x16xf32>
    %23 = arith.addf %21, %22 : vector<2x16xf32>
    %c0_15 = arith.constant 0 : index
    %c0_16 = arith.constant 0 : index
    %24 = vector.load %arg6[%c0_15, %c0_16] : memref<2x16xf32, #tpu.memory_space<vmem>>, vector<2x16xf32>
    tpu.vector_store %arg6[%c0_15, %c0_16], %23 {strides = array<i32>} : memref<2x16xf32, #tpu.memory_space<vmem>>, vector<2x16xf32>,
    %25 = vector.shape_cast %12 : vector<256x16xf32> to vector<1x16x16x16xf32>
    %26 = arith.truncf %25 : vector<1x16x16x16xf32> to vector<1x16x16x16xbf16>
    %c0_17 = arith.constant 0 : index
    %c0_18 = arith.constant 0 : index
    %c0_19 = arith.constant 0 : index
    %c0_20 = arith.constant 0 : index
    %27 = vector.load %arg5[%c0_17, %c0_18, %c0_19, %c0_20] : memref<1x16x16x16xbf16, #tpu.memory_space<vmem>>, vector<1x16x16x16xbf16>
    tpu.vector_store %arg5[%c0_17, %c0_18, %c0_19, %c0_20], %26 {strides = array<i32>} : memref<1x16x16x16xbf16, #tpu.memory_space<vmem>>, vector<1x16x16x16xbf16>,
    return
  }
  func.func @transform_0(%arg0: i32) -> (i32, i32, i32, i32) {
    %c0_i32 = arith.constant 0 : i32
    %c0_i32_0 = arith.constant 0 : i32
    %c0_i32_1 = arith.constant 0 : i32
    %c0_i32_2 = arith.constant 0 : i32
    return %arg0, %c0_i32, %c0_i32_0, %c0_i32_1 : i32, i32, i32, i32
  }
  func.func @transform_1(%arg0: i32) -> (i32, i32) {
    %c0_i32 = arith.constant 0 : i32
    %c0_i32_0 = arith.constant 0 : i32
    %c0_i32_1 = arith.constant 0 : i32
    return %c0_i32, %c0_i32_0 : i32, i32
  }
  func.func @transform_2(%arg0: i32) -> (i32, i32) {
    %c0_i32 = arith.constant 0 : i32
    %c0_i32_0 = arith.constant 0 : i32
    %c0_i32_1 = arith.constant 0 : i32
    return %c0_i32, %c0_i32_0 : i32, i32
  }
  func.func @transform_3(%arg0: i32) -> (i32, i32) {
    %c0_i32 = arith.constant 0 : i32
    %c0_i32_0 = arith.constant 0 : i32
    %c0_i32_1 = arith.constant 0 : i32
    return %c0_i32, %c0_i32_0 : i32, i32
  }
  func.func @transform_4(%arg0: i32) -> (i32, i32, i32, i32) {
    %c0_i32 = arith.constant 0 : i32
    %c0_i32_0 = arith.constant 0 : i32
    %c0_i32_1 = arith.constant 0 : i32
    %c0_i32_2 = arith.constant 0 : i32
    return %arg0, %c0_i32, %c0_i32_0, %c0_i32_1 : i32, i32, i32, i32
  }
  func.func @transform_5(%arg0: i32) -> (i32, i32) {
    %c0_i32 = arith.constant 0 : i32
    %c0_i32_0 = arith.constant 0 : i32
    %c0_i32_1 = arith.constant 0 : i32
    return %c0_i32, %c0_i32_0 : i32, i32
  }
}

module attributes {stable_mosaic.version = 11 : i64} {
  func.func @bn2_conv3_kernel(%arg0: i32, %arg1: memref<1x16x16x16xbf16, #tpu.memory_space<vmem>>, %arg2: memref<1x16xf32, #tpu.memory_space<vmem>>, %arg3: memref<1x16xf32, #tpu.memory_space<vmem>>, %arg4: memref<3x48x4xbf16, #tpu.memory_space<vmem>>, %arg5: memref<1x16x16x4xf32, #tpu.memory_space<vmem>>) attributes {dimension_semantics = [#tpu.dimension_semantics<parallel>], iteration_bounds = array<i64: 2>, scalar_prefetch = 0 : i64, scratch_operands = 0 : i64, tpu.core_type = #tpu.core_type<tc>, window_params = [{transform_indices = @transform_0, window_bounds = array<i64: 1, 16, 16, 16>}, {pipeline_mode = #tpu.pipeline_mode<synchronous>, transform_indices = @transform_1, window_bounds = array<i64: 1, 16>}, {pipeline_mode = #tpu.pipeline_mode<synchronous>, transform_indices = @transform_2, window_bounds = array<i64: 1, 16>}, {pipeline_mode = #tpu.pipeline_mode<synchronous>, transform_indices = @transform_3, window_bounds = array<i64: 3, 48, 4>}, {transform_indices = @transform_4, window_bounds = array<i64: 1, 16, 16, 4>}]} {
    %c0 = arith.constant 0 : index
    %c0_0 = arith.constant 0 : index
    %c0_1 = arith.constant 0 : index
    %c0_2 = arith.constant 0 : index
    %0 = vector.load %arg1[%c0, %c0_0, %c0_1, %c0_2] : memref<1x16x16x16xbf16, #tpu.memory_space<vmem>>, vector<1x16x16x16xbf16>
    %1 = arith.extf %0 : vector<1x16x16x16xbf16> to vector<1x16x16x16xf32>
    %2 = vector.shape_cast %1 : vector<1x16x16x16xf32> to vector<256x16xf32>
    %c0_3 = arith.constant 0 : index
    %c0_4 = arith.constant 0 : index
    %3 = vector.load %arg2[%c0_3, %c0_4] : memref<1x16xf32, #tpu.memory_space<vmem>>, vector<1x16xf32>
    %4 = vector.broadcast %3 : vector<1x16xf32> to vector<256x16xf32>
    %5 = arith.mulf %2, %4 : vector<256x16xf32>
    %c0_5 = arith.constant 0 : index
    %c0_6 = arith.constant 0 : index
    %6 = vector.load %arg3[%c0_5, %c0_6] : memref<1x16xf32, #tpu.memory_space<vmem>>, vector<1x16xf32>
    %7 = vector.broadcast %6 : vector<1x16xf32> to vector<256x16xf32>
    %8 = arith.addf %5, %7 : vector<256x16xf32>
    %cst = arith.constant 0.000000e+00 : f32
    %9 = vector.broadcast %cst : f32 to vector<256x16xf32>
    %10 = arith.maximumf %8, %9 : vector<256x16xf32>
    %11 = vector.shape_cast %10 : vector<256x16xf32> to vector<16x16x16xf32>
    %12 = arith.truncf %11 : vector<16x16x16xf32> to vector<16x16x16xbf16>
    %cst_7 = arith.constant 0.000000e+00 : bf16
    %13 = vector.broadcast %cst_7 : bf16 to vector<16x1x16xbf16>
    %14 = tpu.concatenate %13, %12, %13 in 1 : vector<16x1x16xbf16>, vector<16x16x16xbf16>, vector<16x1x16xbf16> -> vector<16x18x16xbf16>
    %15 = vector.extract_strided_slice %14 {offsets = [0, 0, 0], sizes = [16, 16, 16], strides = [1, 1, 1]} : vector<16x18x16xbf16> to vector<16x16x16xbf16>
    %16 = vector.extract_strided_slice %14 {offsets = [0, 1, 0], sizes = [16, 16, 16], strides = [1, 1, 1]} : vector<16x18x16xbf16> to vector<16x16x16xbf16>
    %17 = vector.extract_strided_slice %14 {offsets = [0, 2, 0], sizes = [16, 16, 16], strides = [1, 1, 1]} : vector<16x18x16xbf16> to vector<16x16x16xbf16>
    %18 = tpu.concatenate %15, %16, %17 in 2 : vector<16x16x16xbf16>, vector<16x16x16xbf16>, vector<16x16x16xbf16> -> vector<16x16x48xbf16>
    %cst_8 = arith.constant 0.000000e+00 : bf16
    %19 = vector.broadcast %cst_8 : bf16 to vector<1x16x48xbf16>
    %20 = tpu.concatenate %19, %18, %19 in 0 : vector<1x16x48xbf16>, vector<16x16x48xbf16>, vector<1x16x48xbf16> -> vector<18x16x48xbf16>
    %cst_9 = arith.constant 0.000000e+00 : f32
    %21 = vector.broadcast %cst_9 : f32 to vector<256x4xf32>
    %22 = vector.extract_strided_slice %20 {offsets = [0, 0, 0], sizes = [16, 16, 48], strides = [1, 1, 1]} : vector<18x16x48xbf16> to vector<16x16x48xbf16>
    %23 = vector.shape_cast %22 : vector<16x16x48xbf16> to vector<256x48xbf16>
    %c0_10 = arith.constant 0 : index
    %c0_11 = arith.constant 0 : index
    %c0_12 = arith.constant 0 : index
    %24 = vector.load %arg4[%c0_10, %c0_11, %c0_12] : memref<3x48x4xbf16, #tpu.memory_space<vmem>>, vector<1x48x4xbf16>
    %25 = vector.shape_cast %24 : vector<1x48x4xbf16> to vector<48x4xbf16>
    %cst_13 = arith.constant dense<0.000000e+00> : vector<256x4xf32>
    %26 = tpu.matmul %23, %25, %cst_13 {dimension_numbers = #tpu.dot_dimension_numbers<[1], [0], [0], [1], [0, 0, 1, 1], [], []>} : vector<256x48xbf16>, vector<48x4xbf16>, vector<256x4xf32> -> vector<256x4xf32>
    %27 = arith.addf %21, %26 : vector<256x4xf32>
    %28 = vector.extract_strided_slice %20 {offsets = [1, 0, 0], sizes = [16, 16, 48], strides = [1, 1, 1]} : vector<18x16x48xbf16> to vector<16x16x48xbf16>
    %29 = vector.shape_cast %28 : vector<16x16x48xbf16> to vector<256x48xbf16>
    %c1 = arith.constant 1 : index
    %c0_14 = arith.constant 0 : index
    %c0_15 = arith.constant 0 : index
    %30 = vector.load %arg4[%c1, %c0_14, %c0_15] : memref<3x48x4xbf16, #tpu.memory_space<vmem>>, vector<1x48x4xbf16>
    %31 = vector.shape_cast %30 : vector<1x48x4xbf16> to vector<48x4xbf16>
    %cst_16 = arith.constant dense<0.000000e+00> : vector<256x4xf32>
    %32 = tpu.matmul %29, %31, %cst_16 {dimension_numbers = #tpu.dot_dimension_numbers<[1], [0], [0], [1], [0, 0, 1, 1], [], []>} : vector<256x48xbf16>, vector<48x4xbf16>, vector<256x4xf32> -> vector<256x4xf32>
    %33 = arith.addf %27, %32 : vector<256x4xf32>
    %34 = vector.extract_strided_slice %20 {offsets = [2, 0, 0], sizes = [16, 16, 48], strides = [1, 1, 1]} : vector<18x16x48xbf16> to vector<16x16x48xbf16>
    %35 = vector.shape_cast %34 : vector<16x16x48xbf16> to vector<256x48xbf16>
    %c2 = arith.constant 2 : index
    %c0_17 = arith.constant 0 : index
    %c0_18 = arith.constant 0 : index
    %36 = vector.load %arg4[%c2, %c0_17, %c0_18] : memref<3x48x4xbf16, #tpu.memory_space<vmem>>, vector<1x48x4xbf16>
    %37 = vector.shape_cast %36 : vector<1x48x4xbf16> to vector<48x4xbf16>
    %cst_19 = arith.constant dense<0.000000e+00> : vector<256x4xf32>
    %38 = tpu.matmul %35, %37, %cst_19 {dimension_numbers = #tpu.dot_dimension_numbers<[1], [0], [0], [1], [0, 0, 1, 1], [], []>} : vector<256x48xbf16>, vector<48x4xbf16>, vector<256x4xf32> -> vector<256x4xf32>
    %39 = arith.addf %33, %38 : vector<256x4xf32>
    %40 = vector.shape_cast %39 : vector<256x4xf32> to vector<1x16x16x4xf32>
    %c0_20 = arith.constant 0 : index
    %c0_21 = arith.constant 0 : index
    %c0_22 = arith.constant 0 : index
    %c0_23 = arith.constant 0 : index
    %41 = vector.load %arg5[%c0_20, %c0_21, %c0_22, %c0_23] : memref<1x16x16x4xf32, #tpu.memory_space<vmem>>, vector<1x16x16x4xf32>
    tpu.vector_store %arg5[%c0_20, %c0_21, %c0_22, %c0_23], %40 {strides = array<i32>} : memref<1x16x16x4xf32, #tpu.memory_space<vmem>>, vector<1x16x16x4xf32>,
    return
  }
  func.func @transform_0(%arg0: i32) -> (i32, i32, i32, i32) {
    %c0_i32 = arith.constant 0 : i32
    %c0_i32_0 = arith.constant 0 : i32
    %c0_i32_1 = arith.constant 0 : i32
    %c0_i32_2 = arith.constant 0 : i32
    return %arg0, %c0_i32, %c0_i32_0, %c0_i32_1 : i32, i32, i32, i32
  }
  func.func @transform_1(%arg0: i32) -> (i32, i32) {
    %c0_i32 = arith.constant 0 : i32
    %c0_i32_0 = arith.constant 0 : i32
    %c0_i32_1 = arith.constant 0 : i32
    return %c0_i32, %c0_i32_0 : i32, i32
  }
  func.func @transform_2(%arg0: i32) -> (i32, i32) {
    %c0_i32 = arith.constant 0 : i32
    %c0_i32_0 = arith.constant 0 : i32
    %c0_i32_1 = arith.constant 0 : i32
    return %c0_i32, %c0_i32_0 : i32, i32
  }
  func.func @transform_3(%arg0: i32) -> (i32, i32, i32) {
    %c0_i32 = arith.constant 0 : i32
    %c0_i32_0 = arith.constant 0 : i32
    %c0_i32_1 = arith.constant 0 : i32
    %c0_i32_2 = arith.constant 0 : i32
    return %c0_i32, %c0_i32_0, %c0_i32_1 : i32, i32, i32
  }
  func.func @transform_4(%arg0: i32) -> (i32, i32, i32, i32) {
    %c0_i32 = arith.constant 0 : i32
    %c0_i32_0 = arith.constant 0 : i32
    %c0_i32_1 = arith.constant 0 : i32
    %c0_i32_2 = arith.constant 0 : i32
    return %arg0, %c0_i32, %c0_i32_0, %c0_i32_1 : i32, i32, i32, i32
  }
}

</mosaic_0001>

<llo_original>
// kernel: dense_block_pallas.3
$region0: #{dense_block_pallas.3}
  #allocation0 [shape = 'u32[]', space=smem, size = 0x4, offset = 0x4, fixed_abs, tag = 'smem constant byte address 0x4 - core index']
  #allocation1 [shape = 'u32[144,128]{1,0:T(1,128)}', space=vmem, size = 0x12000, scoped, tag = 'internal scratch']
  %s0 = inlined_call_operand.vmem [shape: f32[2,16,16,4], index: 0, kind: input, shape index: {}]
  %s1 = inlined_call_operand.vmem [shape: f32[2,4], index: 1, kind: output, shape index: {}]
  %s2 = sld [smem:[#allocation0]]
  $region41: #{dense_block_pallas.3} parent=0
    _
  %s4 = ssub.s32 1, %s2
  %s5 = scalar_select 0, %s4, %s2
  loop: start=0, step=1, limit=4
  $region2: #{dense_block_pallas.3} parent=0 // loop_pre_header
    _
  $region3: #{dense_block_pallas.3} parent=0 // loop_header
    %s7 = sphi 0, %s11
    %p8 = scmp.ge.s32.totalorder %s7, 4
    %s17 = sphi 0, %s19
    %s20 = sphi 0, %s17
    %s21 = sphi 0, %s20
    %s37 = sphi 0, %s21
    %s41 = sphi 0, %s41
    %s43 = sphi 0, %s41
    %s44 = sphi 0, %s43
    %s58 = sphi 0, %s44
  $region4: #{dense_block_pallas.3} parent=0 // loop_header_branch
    %10 = sbr.rel (%p8) target = $region8
  $region5: #{dense_block_pallas.3} parent=0 // loop_body
    %s12 = ssub.s32 %s7, 1
    %s13 = ssub.s32 %s7, 2
    %s14 = sadd.s32 %s7, 1
    %s15 = ssub.s32 %s7, %s14
    %p16 = scmp.eq.s32.totalorder %s15, 0
    %s18 = sadd.s32 %s17, 1
    %s19 = scalar_select %p16, %s17, %s18
    %p22 = pneg %p16
    %p23 = scmp.eq.s32.totalorder %s7, 1
    %p24 = por %p22, %p23
    %p25 = scmp.ne.s32.totalorder %s17, %s20
    %p26 = scmp.eq.s32.totalorder %s7, 0
    %p27 = por %p25, %p26
    %p28 = scmp.ne.s32.totalorder %s17, %s20
    %p29 = scmp.eq.s32.totalorder %s12, 1
    %p30 = por %p28, %p29
    %p31 = scmp.ne.s32.totalorder %s20, %s21
    %p32 = scmp.eq.s32.totalorder %s12, 0
    %p33 = por %p31, %p32
    %p34 = scmp.ne.s32.totalorder %s20, %s21
    %p35 = scmp.eq.s32.totalorder %s13, 1
    %p36 = por %p34, %p35
    %p38 = scmp.ne.s32.totalorder %s21, %s37
    %p39 = scmp.eq.s32.totalorder %s13, 0
    %p40 = por %p38, %p39
    %s42 = sadd.s32 %s41, 1
    %p45 = scmp.eq.s32.totalorder %s7, 1
    %p46 = scmp.ne.s32.totalorder %s41, %s43
    %p47 = scmp.eq.s32.totalorder %s7, 0
    %p48 = por %p46, %p47
    %p49 = scmp.ne.s32.totalorder %s41, %s43
    %p50 = scmp.eq.s32.totalorder %s12, 1
    %p51 = por %p49, %p50
    %p52 = scmp.ne.s32.totalorder %s43, %s44
    %p53 = scmp.eq.s32.totalorder %s12, 0
    %p54 = por %p52, %p53
    %p55 = scmp.ne.s32.totalorder %s43, %s44
    %p56 = scmp.eq.s32.totalorder %s13, 1
    %p57 = por %p55, %p56
    %p59 = scmp.ne.s32.totalorder %s44, %s58
    %p60 = scmp.eq.s32.totalorder %s13, 0
    %p61 = por %p59, %p60
    %p62 = scmp.le.s32.totalorder 1, %s7
    %p63 = scmp.lt.s32.totalorder %s7, 3
    %p64 = pnand %p62, %p63
    %p65 = pneg %p64
    // Predicated region
    $region9: #{dense_block_pallas.3} parent=5 // pred_check
      _
    $region10: #{dense_block_pallas.3} parent=5 // pred_check_branch
      %67 = sbr.rel (%p64) target = $region12
    $region11: #{dense_block_pallas.3} parent=5 // pred_region
      %s68 = ssub.s32 %s7, 1
    $region12: #{dense_block_pallas.3} parent=5 // pred_fallthru
      _
    %p69 = scmp.lt.s32.totalorder %s7, 2
    // Predicated region
    $region13: #{dense_block_pallas.3} parent=5 // pred_check
      %p70 = pneg %p69
    $region14: #{dense_block_pallas.3} parent=5 // pred_check_branch
      %72 = sbr.rel (%p70) target = $region16
    $region15: #{dense_block_pallas.3} parent=5 // pred_region
      // Predicated region
      $region17: #{dense_block_pallas.3} parent=15 // pred_check
        %p73 = pneg %p27
      $region18: #{dense_block_pallas.3} parent=15 // pred_check_branch
        %75 = sbr.rel (%p73) target = $region20
      $region19: #{dense_block_pallas.3} parent=15 // pred_region
        %p76 = scmp.lt.s32.totalorder %s7, 1
        %s77 = scalar_select %p76, %s7, 1
        %s78 = smul.addr %s77, 32
        %s79 = smul.addr %s78, 8
        %s80 = scalar_lea.vmem %s0, %s79
      $region20: #{dense_block_pallas.3} parent=15 // pred_fallthru
        _
    $region16: #{dense_block_pallas.3} parent=5 // pred_fallthru
      _
    %p81 = scmp.le.s32.totalorder 1, %s7
    %p82 = scmp.lt.s32.totalorder %s7, 3
    %p83 = pnand %p81, %p82
    %p84 = pneg %p83
    // Predicated region
    $region21: #{dense_block_pallas.3} parent=5 // pred_check
      _
    $region22: #{dense_block_pallas.3} parent=5 // pred_check_branch
      %86 = sbr.rel (%p83) target = $region24
    $region23: #{dense_block_pallas.3} parent=5 // pred_region
      %s87 = ssub.s32 %s7, 1
      %p88 = scmp.lt.s32.totalorder %s12, 1
      %s89 = scalar_select %p88, %s12, 1
      %s90 = smul.addr %s89, 32
      %s91 = smul.addr %s90, 8
      %s92 = scalar_lea.vmem %s0, %s91
      %p93 = pneg %p33
      %p94 = pneg %p30
      %p95 = pneg %p54
      %p96 = pneg %p51
      %p97 = scmp.lt.s32.totalorder %s12, 1
      %s98 = scalar_select %p97, %s12, 1
      %s99 = smul.addr %s98, 32
      %s100 = smul.addr %s99, 8
      %s101 = scalar_lea.vmem %s0, %s100
      %v102 = vld [vmem:[%s101] sm:$0xff]
      %v103 = vld [vmem:[%s101 + $0x8] sm:$0xff]
      %v104 = vld [vmem:[%s101 + $0x10] sm:$0xff]
      %v105 = vld [vmem:[%s101 + $0x18] sm:$0xff]
      %v106 = vld [vmem:[%s101 + $0x20] sm:$0xff]
      %v107 = vld [vmem:[%s101 + $0x28] sm:$0xff]
      %v108 = vld [vmem:[%s101 + $0x30] sm:$0xff]
      %v109 = vld [vmem:[%s101 + $0x38] sm:$0xff]
      %v110 = vld [vmem:[%s101 + $0x40] sm:$0xff]
      %v111 = vld [vmem:[%s101 + $0x48] sm:$0xff]
      %v112 = vld [vmem:[%s101 + $0x50] sm:$0xff]
      %v113 = vld [vmem:[%s101 + $0x58] sm:$0xff]
      %v114 = vld [vmem:[%s101 + $0x60] sm:$0xff]
      %v115 = vld [vmem:[%s101 + $0x68] sm:$0xff]
      %v116 = vld [vmem:[%s101 + $0x70] sm:$0xff]
      %v117 = vld [vmem:[%s101 + $0x78] sm:$0xff]
      %v118 = vld [vmem:[%s101 + $0x80] sm:$0xff]
      %v119 = vld [vmem:[%s101 + $0x88] sm:$0xff]
      %v120 = vld [vmem:[%s101 + $0x90] sm:$0xff]
      %v121 = vld [vmem:[%s101 + $0x98] sm:$0xff]
      %v122 = vld [vmem:[%s101 + $0xa0] sm:$0xff]
      %v123 = vld [vmem:[%s101 + $0xa8] sm:$0xff]
      %v124 = vld [vmem:[%s101 + $0xb0] sm:$0xff]
      %v125 = vld [vmem:[%s101 + $0xb8] sm:$0xff]
      %v126 = vld [vmem:[%s101 + $0xc0] sm:$0xff]
      %v127 = vld [vmem:[%s101 + $0xc8] sm:$0xff]
      %v128 = vld [vmem:[%s101 + $0xd0] sm:$0xff]
      %v129 = vld [vmem:[%s101 + $0xd8] sm:$0xff]
      %v130 = vld [vmem:[%s101 + $0xe0] sm:$0xff]
      %v131 = vld [vmem:[%s101 + $0xe8] sm:$0xff]
      %v132 = vld [vmem:[%s101 + $0xf0] sm:$0xff]
      %v133 = vld [vmem:[%s101 + $0xf8] sm:$0xff]
      %vm134 = vcmask 31744
      %v135 = vsel %vm134, %v102, 0.0
      %v136 = vsel %vm134, %v103, 0.0
      %v137 = vadd.f32 %v135, %v136
      %v138 = vsel %vm134, %v104, 0.0
      %v139 = vadd.f32 %v137, %v138
      %v140 = vsel %vm134, %v105, 0.0
      %v141 = vadd.f32 %v139, %v140
      %v142 = vsel %vm134, %v106, 0.0
      %v143 = vadd.f32 %v141, %v142
      %v144 = vsel %vm134, %v107, 0.0
      %v145 = vadd.f32 %v143, %v144
      %v146 = vsel %vm134, %v108, 0.0
      %v147 = vadd.f32 %v145, %v146
      %v148 = vsel %vm134, %v109, 0.0
      %v149 = vadd.f32 %v147, %v148
      %v150 = vsel %vm134, %v110, 0.0
      %v151 = vadd.f32 %v149, %v150
      %v152 = vsel %vm134, %v111, 0.0
      %v153 = vadd.f32 %v151, %v152
      %v154 = vsel %vm134, %v112, 0.0
      %v155 = vadd.f32 %v153, %v154
      %v156 = vsel %vm134, %v113, 0.0
      %v157 = vadd.f32 %v155, %v156
      %v158 = vsel %vm134, %v114, 0.0
      %v159 = vadd.f32 %v157, %v158
      %v160 = vsel %vm134, %v115, 0.0
      %v161 = vadd.f32 %v159, %v160
      %v162 = vsel %vm134, %v116, 0.0
      %v163 = vadd.f32 %v161, %v162
      %v164 = vsel %vm134, %v117, 0.0
      %v165 = vadd.f32 %v163, %v164
      %v166 = vsel %vm134, %v118, 0.0
      %v167 = vadd.f32 %v165, %v166
      %v168 = vsel %vm134, %v119, 0.0
      %v169 = vadd.f32 %v167, %v168
      %v170 = vsel %vm134, %v120, 0.0
      %v171 = vadd.f32 %v169, %v170
      %v172 = vsel %vm134, %v121, 0.0
      %v173 = vadd.f32 %v171, %v172
      %v174 = vsel %vm134, %v122, 0.0
      %v175 = vadd.f32 %v173, %v174
      %v176 = vsel %vm134, %v123, 0.0
      %v177 = vadd.f32 %v175, %v176
      %v178 = vsel %vm134, %v124, 0.0
      %v179 = vadd.f32 %v177, %v178
      %v180 = vsel %vm134, %v125, 0.0
      %v181 = vadd.f32 %v179, %v180
      %v182 = vsel %vm134, %v126, 0.0
      %v183 = vadd.f32 %v181, %v182
      %v184 = vsel %vm134, %v127, 0.0
      %v185 = vadd.f32 %v183, %v184
      %v186 = vsel %vm134, %v128, 0.0
      %v187 = vadd.f32 %v185, %v186
      %v188 = vsel %vm134, %v129, 0.0
      %v189 = vadd.f32 %v187, %v188
      %v190 = vsel %vm134, %v130, 0.0
      %v191 = vadd.f32 %v189, %v190
      %v192 = vsel %vm134, %v131, 0.0
      %v193 = vadd.f32 %v191, %v192
      %v194 = vsel %vm134, %v132, 0.0
      %v195 = vadd.f32 %v193, %v194
      %v196 = vsel %vm134, %v133, 0.0
      %v197 = vadd.f32 %v195, %v196
      %v198 = vrot.slane %v197, 4
      %v199 = vadd.f32 %v197, %v198
      %v200 = vrot.slane %v199, 2
      %v201 = vadd.f32 %v199, %v200
      %v202 = vrot.slane %v201, 1
      %v203 = vadd.f32 %v201, %v202
      %v204 = vmul.f32 %v102, %v102
      %v205 = vmul.f32 %v103, %v103
      %v206 = vmul.f32 %v104, %v104
      %v207 = vmul.f32 %v105, %v105
      %v208 = vmul.f32 %v106, %v106
      %v209 = vmul.f32 %v107, %v107
      %v210 = vmul.f32 %v108, %v108
      %v211 = vmul.f32 %v109, %v109
      %v212 = vmul.f32 %v110, %v110
      %v213 = vmul.f32 %v111, %v111
      %v214 = vmul.f32 %v112, %v112
      %v215 = vmul.f32 %v113, %v113
      %v216 = vmul.f32 %v114, %v114
      %v217 = vmul.f32 %v115, %v115
      %v218 = vmul.f32 %v116, %v116
      %v219 = vmul.f32 %v117, %v117
      %v220 = vmul.f32 %v118, %v118
      %v221 = vmul.f32 %v119, %v119
      %v222 = vmul.f32 %v120, %v120
      %v223 = vmul.f32 %v121, %v121
      %v224 = vmul.f32 %v122, %v122
      %v225 = vmul.f32 %v123, %v123
      %v226 = vmul.f32 %v124, %v124
      %v227 = vmul.f32 %v125, %v125
      %v228 = vmul.f32 %v126, %v126
      %v229 = vmul.f32 %v127, %v127
      %v230 = vmul.f32 %v128, %v128
      %v231 = vmul.f32 %v129, %v129
      %v232 = vmul.f32 %v130, %v130
      %v233 = vmul.f32 %v131, %v131
      %v234 = vmul.f32 %v132, %v132
      %v235 = vmul.f32 %v133, %v133
      %v236 = vsel %vm134, %v204, 0.0
      %v237 = vsel %vm134, %v205, 0.0
      %v238 = vadd.f32 %v236, %v237
      %v239 = vsel %vm134, %v206, 0.0
      %v240 = vadd.f32 %v238, %v239
      %v241 = vsel %vm134, %v207, 0.0
      %v242 = vadd.f32 %v240, %v241
      %v243 = vsel %vm134, %v208, 0.0
      %v244 = vadd.f32 %v242, %v243
      %v245 = vsel %vm134, %v209, 0.0
      %v246 = vadd.f32 %v244, %v245
      %v247 = vsel %vm134, %v210, 0.0
      %v248 = vadd.f32 %v246, %v247
      %v249 = vsel %vm134, %v211, 0.0
      %v250 = vadd.f32 %v248, %v249
      %v251 = vsel %vm134, %v212, 0.0
      %v252 = vadd.f32 %v250, %v251
      %v253 = vsel %vm134, %v213, 0.0
      %v254 = vadd.f32 %v252, %v253
      %v255 = vsel %vm134, %v214, 0.0
      %v256 = vadd.f32 %v254, %v255
      %v257 = vsel %vm134, %v215, 0.0
      %v258 = vadd.f32 %v256, %v257
      %v259 = vsel %vm134, %v216, 0.0
      %v260 = vadd.f32 %v258, %v259
      %v261 = vsel %vm134, %v217, 0.0
      %v262 = vadd.f32 %v260, %v261
      %v263 = vsel %vm134, %v218, 0.0
      %v264 = vadd.f32 %v262, %v263
      %v265 = vsel %vm134, %v219, 0.0
      %v266 = vadd.f32 %v264, %v265
      %v267 = vsel %vm134, %v220, 0.0
      %v268 = vadd.f32 %v266, %v267
      %v269 = vsel %vm134, %v221, 0.0
      %v270 = vadd.f32 %v268, %v269
      %v271 = vsel %vm134, %v222, 0.0
      %v272 = vadd.f32 %v270, %v271
      %v273 = vsel %vm134, %v223, 0.0
      %v274 = vadd.f32 %v272, %v273
      %v275 = vsel %vm134, %v224, 0.0
      %v276 = vadd.f32 %v274, %v275
      %v277 = vsel %vm134, %v225, 0.0
      %v278 = vadd.f32 %v276, %v277
      %v279 = vsel %vm134, %v226, 0.0
      %v280 = vadd.f32 %v278, %v279
      %v281 = vsel %vm134, %v227, 0.0
      %v282 = vadd.f32 %v280, %v281
      %v283 = vsel %vm134, %v228, 0.0
      %v284 = vadd.f32 %v282, %v283
      %v285 = vsel %vm134, %v229, 0.0
      %v286 = vadd.f32 %v284, %v285
      %v287 = vsel %vm134, %v230, 0.0
      %v288 = vadd.f32 %v286, %v287
      %v289 = vsel %vm134, %v231, 0.0
      %v290 = vadd.f32 %v288, %v289
      %v291 = vsel %vm134, %v232, 0.0
      %v292 = vadd.f32 %v290, %v291
      %v293 = vsel %vm134, %v233, 0.0
      %v294 = vadd.f32 %v292, %v293
      %v295 = vsel %vm134, %v234, 0.0
      %v296 = vadd.f32 %v294, %v295
      %v297 = vsel %vm134, %v235, 0.0
      %v298 = vadd.f32 %v296, %v297
      %v299 = vrot.slane %v298, 4
      %v300 = vadd.f32 %v298, %v299
      %v301 = vrot.slane %v300, 2
      %v302 = vadd.f32 %v300, %v301
      %v303 = vrot.slane %v302, 1
      %v304 = vadd.f32 %v302, %v303
      %p305 = scmp.eq.s32.totalorder %s12, 0
      // Predicated region
      $region25: #{dense_block_pallas.3} parent=23 // pred_check
        %p306 = pneg %p305
      $region26: #{dense_block_pallas.3} parent=23 // pred_check_branch
        %308 = sbr.rel (%p306) target = $region28
      $region27: #{dense_block_pallas.3} parent=23 // pred_region
        %vm309 = vcmask 25600
        %310 = vst.msk [vmem:[%s1] sm:$0x3] %vm309, 0.0
      $region28: #{dense_block_pallas.3} parent=23 // pred_fallthru
        _
      %v311 = vld [vmem:[%s1] sm:$0x3]
      %vm312 = vcmask 1040384
      %v313 = vsel %vm312, %v203, %v304
      %v314 = vadd.f32 %v311, %v313
      %vm315 = vcmask 25600
      %316 = vst.msk [vmem:[%s1] sm:$0x3] %vm315, %v314
      // Predicated region
      $region29: #{dense_block_pallas.3} parent=23 // pred_check
        %p317 = pneg %p51
      $region30: #{dense_block_pallas.3} parent=23 // pred_check_branch
        %319 = sbr.rel (%p317) target = $region32
      $region31: #{dense_block_pallas.3} parent=23 // pred_region
        _
      $region32: #{dense_block_pallas.3} parent=23 // pred_fallthru
        _
      // Predicated region
      $region33: #{dense_block_pallas.3} parent=23 // pred_check
        %p320 = pneg %p51
      $region34: #{dense_block_pallas.3} parent=23 // pred_check_branch
        %322 = sbr.rel (%p320) target = $region36
      $region35: #{dense_block_pallas.3} parent=23 // pred_region
        _
      $region36: #{dense_block_pallas.3} parent=23 // pred_fallthru
        _
    $region24: #{dense_block_pallas.3} parent=5 // pred_fallthru
      _
    %p323 = scmp.le.s32.totalorder 2, %s7
    // Predicated region
    $region37: #{dense_block_pallas.3} parent=5 // pred_check
      %p324 = pneg %p323
    $region38: #{dense_block_pallas.3} parent=5 // pred_check_branch
      %326 = sbr.rel (%p324) target = $region40
    $region39: #{dense_block_pallas.3} parent=5 // pred_region
      %s327 = ssub.s32 %s7, 2
    $region40: #{dense_block_pallas.3} parent=5 // pred_fallthru
      _
  $region6: #{dense_block_pallas.3} parent=0 // loop_footer
    %s11 = sadd.s32 1, %s7
  $region7: #{dense_block_pallas.3} parent=0 // loop_footer_branch
    %6 = sbr.rel target = $region3
  $region8: #{dense_block_pallas.3} parent=0 // loop_exit
    _

// kernel: dense_block_pallas.4
$region0: #{dense_block_pallas.4}
  #allocation0 [shape = 'u32[]', space=smem, size = 0x4, offset = 0x4, fixed_abs, tag = 'smem constant byte address 0x4 - core index']
  #allocation1 [shape = 'u32[144,128]{1,0:T(1,128)}', space=vmem, size = 0x12000, scoped, tag = 'internal scratch']
  %s0 = inlined_call_operand.vmem [shape: f32[2,16,16,4], index: 0, kind: input, shape index: {}]
  %s1 = inlined_call_operand.vmem [shape: f32[1,4], index: 1, kind: input, shape index: {}]
  %s2 = inlined_call_operand.vmem [shape: f32[1,4], index: 2, kind: input, shape index: {}]
  %s3 = inlined_call_operand.vmem [shape: bf16[4,16], index: 3, kind: input, shape index: {}]
  %s4 = inlined_call_operand.vmem [shape: bf16[2,16,16,16], index: 4, kind: output, shape index: {0}]
  %s5 = inlined_call_operand.vmem [shape: f32[2,16], index: 5, kind: output, shape index: {1}]
  %6 = xla_tuple %s4, %s5
  %s7 = sld [smem:[#allocation0]]
  $region61: #{dense_block_pallas.4} parent=0
    _
  %s9 = ssub.s32 1, %s7
  %s10 = scalar_select 0, %s9, %s7
  loop: start=0, step=1, limit=4
  $region2: #{dense_block_pallas.4} parent=0 // loop_pre_header
    _
  $region3: #{dense_block_pallas.4} parent=0 // loop_header
    %s12 = sphi 0, %s16
    %p13 = scmp.ge.s32.totalorder %s12, 4
    %s22 = sphi 0, %s24
    %s25 = sphi 0, %s22
    %s26 = sphi 0, %s25
    %s42 = sphi 0, %s26
    %s46 = sphi 0, %s46
    %s48 = sphi 0, %s46
    %s49 = sphi 0, %s48
    %s63 = sphi 0, %s49
    %s67 = sphi 0, %s67
    %s69 = sphi 0, %s67
    %s70 = sphi 0, %s69
    %s84 = sphi 0, %s70
    %s88 = sphi 0, %s88
    %s90 = sphi 0, %s88
    %s91 = sphi 0, %s90
    %s105 = sphi 0, %s91
    %s111 = sphi 0, %s113
    %s114 = sphi 0, %s111
    %s115 = sphi 0, %s114
    %s131 = sphi 0, %s115
    %s135 = sphi 0, %s135
    %s137 = sphi 0, %s135
    %s138 = sphi 0, %s137
    %s152 = sphi 0, %s138
  $region4: #{dense_block_pallas.4} parent=0 // loop_header_branch
    %15 = sbr.rel (%p13) target = $region8
  $region5: #{dense_block_pallas.4} parent=0 // loop_body
    %s17 = ssub.s32 %s12, 1
    %s18 = ssub.s32 %s12, 2
    %s19 = sadd.s32 %s12, 1
    %s20 = ssub.s32 %s12, %s19
    %p21 = scmp.eq.s32.totalorder %s20, 0
    %s23 = sadd.s32 %s22, 1
    %s24 = scalar_select %p21, %s22, %s23
    %p27 = pneg %p21
    %p28 = scmp.eq.s32.totalorder %s12, 1
    %p29 = por %p27, %p28
    %p30 = scmp.ne.s32.totalorder %s22, %s25
    %p31 = scmp.eq.s32.totalorder %s12, 0
    %p32 = por %p30, %p31
    %p33 = scmp.ne.s32.totalorder %s22, %s25
    %p34 = scmp.eq.s32.totalorder %s17, 1
    %p35 = por %p33, %p34
    %p36 = scmp.ne.s32.totalorder %s25, %s26
    %p37 = scmp.eq.s32.totalorder %s17, 0
    %p38 = por %p36, %p37
    %p39 = scmp.ne.s32.totalorder %s25, %s26
    %p40 = scmp.eq.s32.totalorder %s18, 1
    %p41 = por %p39, %p40
    %p43 = scmp.ne.s32.totalorder %s26, %s42
    %p44 = scmp.eq.s32.totalorder %s18, 0
    %p45 = por %p43, %p44
    %s47 = sadd.s32 %s46, 1
    %p50 = scmp.eq.s32.totalorder %s12, 1
    %p51 = scmp.ne.s32.totalorder %s46, %s48
    %p52 = scmp.eq.s32.totalorder %s12, 0
    %p53 = por %p51, %p52
    %p54 = scmp.ne.s32.totalorder %s46, %s48
    %p55 = scmp.eq.s32.totalorder %s17, 1
    %p56 = por %p54, %p55
    %p57 = scmp.ne.s32.totalorder %s48, %s49
    %p58 = scmp.eq.s32.totalorder %s17, 0
    %p59 = por %p57, %p58
    %p60 = scmp.ne.s32.totalorder %s48, %s49
    %p61 = scmp.eq.s32.totalorder %s18, 1
    %p62 = por %p60, %p61
    %p64 = scmp.ne.s32.totalorder %s49, %s63
    %p65 = scmp.eq.s32.totalorder %s18, 0
    %p66 = por %p64, %p65
    %s68 = sadd.s32 %s67, 1
    %p71 = scmp.eq.s32.totalorder %s12, 1
    %p72 = scmp.ne.s32.totalorder %s67, %s69
    %p73 = scmp.eq.s32.totalorder %s12, 0
    %p74 = por %p72, %p73
    %p75 = scmp.ne.s32.totalorder %s67, %s69
    %p76 = scmp.eq.s32.totalorder %s17, 1
    %p77 = por %p75, %p76
    %p78 = scmp.ne.s32.totalorder %s69, %s70
    %p79 = scmp.eq.s32.totalorder %s17, 0
    %p80 = por %p78, %p79
    %p81 = scmp.ne.s32.totalorder %s69, %s70
    %p82 = scmp.eq.s32.totalorder %s18, 1
    %p83 = por %p81, %p82
    %p85 = scmp.ne.s32.totalorder %s70, %s84
    %p86 = scmp.eq.s32.totalorder %s18, 0
    %p87 = por %p85, %p86
    %s89 = sadd.s32 %s88, 1
    %p92 = scmp.eq.s32.totalorder %s12, 1
    %p93 = scmp.ne.s32.totalorder %s88, %s90
    %p94 = scmp.eq.s32.totalorder %s12, 0
    %p95 = por %p93, %p94
    %p96 = scmp.ne.s32.totalorder %s88, %s90
    %p97 = scmp.eq.s32.totalorder %s17, 1
    %p98 = por %p96, %p97
    %p99 = scmp.ne.s32.totalorder %s90, %s91
    %p100 = scmp.eq.s32.totalorder %s17, 0
    %p101 = por %p99, %p100
    %p102 = scmp.ne.s32.totalorder %s90, %s91
    %p103 = scmp.eq.s32.totalorder %s18, 1
    %p104 = por %p102, %p103
    %p106 = scmp.ne.s32.totalorder %s91, %s105
    %p107 = scmp.eq.s32.totalorder %s18, 0
    %p108 = por %p106, %p107
    %s109 = ssub.s32 %s12, %s19
    %p110 = scmp.eq.s32.totalorder %s109, 0
    %s112 = sadd.s32 %s111, 1
    %s113 = scalar_select %p110, %s111, %s112
    %p116 = pneg %p110
    %p117 = scmp.eq.s32.totalorder %s12, 1
    %p118 = por %p116, %p117
    %p119 = scmp.ne.s32.totalorder %s111, %s114
    %p120 = scmp.eq.s32.totalorder %s12, 0
    %p121 = por %p119, %p120
    %p122 = scmp.ne.s32.totalorder %s111, %s114
    %p123 = scmp.eq.s32.totalorder %s17, 1
    %p124 = por %p122, %p123
    %p125 = scmp.ne.s32.totalorder %s114, %s115
    %p126 = scmp.eq.s32.totalorder %s17, 0
    %p127 = por %p125, %p126
    %p128 = scmp.ne.s32.totalorder %s114, %s115
    %p129 = scmp.eq.s32.totalorder %s18, 1
    %p130 = por %p128, %p129
    %p132 = scmp.ne.s32.totalorder %s115, %s131
    %p133 = scmp.eq.s32.totalorder %s18, 0
    %p134 = por %p132, %p133
    %s136 = sadd.s32 %s135, 1
    %p139 = scmp.eq.s32.totalorder %s12, 1
    %p140 = scmp.ne.s32.totalorder %s135, %s137
    %p141 = scmp.eq.s32.totalorder %s12, 0
    %p142 = por %p140, %p141
    %p143 = scmp.ne.s32.totalorder %s135, %s137
    %p144 = scmp.eq.s32.totalorder %s17, 1
    %p145 = por %p143, %p144
    %p146 = scmp.ne.s32.totalorder %s137, %s138
    %p147 = scmp.eq.s32.totalorder %s17, 0
    %p148 = por %p146, %p147
    %p149 = scmp.ne.s32.totalorder %s137, %s138
    %p150 = scmp.eq.s32.totalorder %s18, 1
    %p151 = por %p149, %p150
    %p153 = scmp.ne.s32.totalorder %s138, %s152
    %p154 = scmp.eq.s32.totalorder %s18, 0
    %p155 = por %p153, %p154
    %p156 = scmp.le.s32.totalorder 1, %s12
    %p157 = scmp.lt.s32.totalorder %s12, 3
    %p158 = pnand %p156, %p157
    %p159 = pneg %p158
    // Predicated region
    $region9: #{dense_block_pallas.4} parent=5 // pred_check
      _
    $region10: #{dense_block_pallas.4} parent=5 // pred_check_branch
      %161 = sbr.rel (%p158) target = $region12
    $region11: #{dense_block_pallas.4} parent=5 // pred_region
      %s162 = ssub.s32 %s12, 1
      // Predicated region
      $region13: #{dense_block_pallas.4} parent=11 // pred_check
        %p163 = pneg %p59
      $region14: #{dense_block_pallas.4} parent=11 // pred_check_branch
        %165 = sbr.rel (%p163) target = $region16
      $region15: #{dense_block_pallas.4} parent=11 // pred_region
        _
      $region16: #{dense_block_pallas.4} parent=11 // pred_fallthru
        _
      // Predicated region
      $region17: #{dense_block_pallas.4} parent=11 // pred_check
        %p166 = pneg %p80
      $region18: #{dense_block_pallas.4} parent=11 // pred_check_branch
        %168 = sbr.rel (%p166) target = $region20
      $region19: #{dense_block_pallas.4} parent=11 // pred_region
        _
      $region20: #{dense_block_pallas.4} parent=11 // pred_fallthru
        _
      // Predicated region
      $region21: #{dense_block_pallas.4} parent=11 // pred_check
        %p169 = pneg %p101
      $region22: #{dense_block_pallas.4} parent=11 // pred_check_branch
        %171 = sbr.rel (%p169) target = $region24
      $region23: #{dense_block_pallas.4} parent=11 // pred_region
        _
      $region24: #{dense_block_pallas.4} parent=11 // pred_fallthru
        _
    $region12: #{dense_block_pallas.4} parent=5 // pred_fallthru
      _
    %p172 = scmp.lt.s32.totalorder %s12, 2
    // Predicated region
    $region25: #{dense_block_pallas.4} parent=5 // pred_check
      %p173 = pneg %p172
    $region26: #{dense_block_pallas.4} parent=5 // pred_check_branch
      %175 = sbr.rel (%p173) target = $region28
    $region27: #{dense_block_pallas.4} parent=5 // pred_region
      // Predicated region
      $region29: #{dense_block_pallas.4} parent=27 // pred_check
        %p176 = pneg %p32
      $region30: #{dense_block_pallas.4} parent=27 // pred_check_branch
        %178 = sbr.rel (%p176) target = $region32
      $region31: #{dense_block_pallas.4} parent=27 // pred_region
        %p179 = scmp.lt.s32.totalorder %s12, 1
        %s180 = scalar_select %p179, %s12, 1
        %s181 = smul.addr %s180, 32
        %s182 = smul.addr %s181, 8
        %s183 = scalar_lea.vmem %s0, %s182
      $region32: #{dense_block_pallas.4} parent=27 // pred_fallthru
        _
    $region28: #{dense_block_pallas.4} parent=5 // pred_fallthru
      _
    %p184 = scmp.le.s32.totalorder 1, %s12
    %p185 = scmp.lt.s32.totalorder %s12, 3
    %p186 = pnand %p184, %p185
    %p187 = pneg %p186
    // Predicated region
    $region33: #{dense_block_pallas.4} parent=5 // pred_check
      _
    $region34: #{dense_block_pallas.4} parent=5 // pred_check_branch
      %189 = sbr.rel (%p186) target = $region36
    $region35: #{dense_block_pallas.4} parent=5 // pred_region
      %s190 = ssub.s32 %s12, 1
      %p191 = scmp.lt.s32.totalorder %s17, 1
      %s192 = scalar_select %p191, %s17, 1
      %s193 = smul.addr %s192, 32
      %s194 = smul.addr %s193, 8
      %s195 = scalar_lea.vmem %s0, %s194
      %p196 = pneg %p38
      %p197 = pneg %p35
      %p198 = pneg %p59
      %p199 = pneg %p56
      %p200 = pneg %p80
      %p201 = pneg %p77
      %p202 = pneg %p101
      %p203 = pneg %p98
      %p204 = pneg %p127
      %p205 = pneg %p124
      %p206 = scmp.lt.s32.totalorder %s17, 1
      %s207 = scalar_select %p206, %s17, 1
      %s208 = smul.addr %s207, 32
      %s209 = smul.addr %s208, 4
      %s210 = scalar_lea.vmem %s4, %s209
      %p211 = pneg %p148
      %p212 = pneg %p145
      %p213 = scmp.lt.s32.totalorder %s17, 1
      %s214 = scalar_select %p213, %s17, 1
      %s215 = smul.addr %s214, 32
      %s216 = smul.addr %s215, 8
      %s217 = scalar_lea.vmem %s0, %s216
      %p218 = scmp.lt.s32.totalorder %s17, 1
      %s219 = scalar_select %p218, %s17, 1
      %s220 = smul.addr %s219, 32
      %s221 = smul.addr %s220, 4
      %s222 = scalar_lea.vmem %s4, %s221
      %v224 = vld [vmem:[%s217] sm:$0xff]
      %v225 = vld [vmem:[%s217 + $0x8] sm:$0xff]
      %v226 = vld [vmem:[%s217 + $0x10] sm:$0xff]
      %v227 = vld [vmem:[%s217 + $0x18] sm:$0xff]
      %v228 = vld [vmem:[%s217 + $0x20] sm:$0xff]
      %v229 = vld [vmem:[%s217 + $0x28] sm:$0xff]
      %v230 = vld [vmem:[%s217 + $0x30] sm:$0xff]
      %v231 = vld [vmem:[%s217 + $0x38] sm:$0xff]
      %v232 = vld [vmem:[%s217 + $0x40] sm:$0xff]
      %v233 = vld [vmem:[%s217 + $0x48] sm:$0xff]
      %v234 = vld [vmem:[%s217 + $0x50] sm:$0xff]
      %v235 = vld [vmem:[%s217 + $0x58] sm:$0xff]
      %v236 = vld [vmem:[%s217 + $0x60] sm:$0xff]
      %v237 = vld [vmem:[%s217 + $0x68] sm:$0xff]
      %v238 = vld [vmem:[%s217 + $0x70] sm:$0xff]
      %v239 = vld [vmem:[%s217 + $0x78] sm:$0xff]
      %v240 = vld [vmem:[%s217 + $0x80] sm:$0xff]
      %v241 = vld [vmem:[%s217 + $0x88] sm:$0xff]
      %v242 = vld [vmem:[%s217 + $0x90] sm:$0xff]
      %v243 = vld [vmem:[%s217 + $0x98] sm:$0xff]
      %v244 = vld [vmem:[%s217 + $0xa0] sm:$0xff]
      %v245 = vld [vmem:[%s217 + $0xa8] sm:$0xff]
      %v246 = vld [vmem:[%s217 + $0xb0] sm:$0xff]
      %v247 = vld [vmem:[%s217 + $0xb8] sm:$0xff]
      %v248 = vld [vmem:[%s217 + $0xc0] sm:$0xff]
      %v249 = vld [vmem:[%s217 + $0xc8] sm:$0xff]
      %v250 = vld [vmem:[%s217 + $0xd0] sm:$0xff]
      %v251 = vld [vmem:[%s217 + $0xd8] sm:$0xff]
      %v252 = vld [vmem:[%s217 + $0xe0] sm:$0xff]
      %v253 = vld [vmem:[%s217 + $0xe8] sm:$0xff]
      %v254 = vld [vmem:[%s217 + $0xf0] sm:$0xff]
      %v255 = vld [vmem:[%s217 + $0xf8] sm:$0xff]
      %v256 = vld [vmem:[%s1] sm:$0x1]
      %v258 = vlaneseq
      %v259 = vshrl.u32 %v258, 7
      %v260 = vsub.s32 0, %v259
      %v261 = vrot.slane %v256, %v260
      %v263 = vmul.f32 %v224, %v261
      %v264 = vmul.f32 %v225, %v261
      %v265 = vmul.f32 %v226, %v261
      %v266 = vmul.f32 %v227, %v261
      %v267 = vmul.f32 %v228, %v261
      %v268 = vmul.f32 %v229, %v261
      %v269 = vmul.f32 %v230, %v261
      %v270 = vmul.f32 %v231, %v261
      %v271 = vmul.f32 %v232, %v261
      %v272 = vmul.f32 %v233, %v261
      %v273 = vmul.f32 %v234, %v261
      %v274 = vmul.f32 %v235, %v261
      %v275 = vmul.f32 %v236, %v261
      %v276 = vmul.f32 %v237, %v261
      %v277 = vmul.f32 %v238, %v261
      %v278 = vmul.f32 %v239, %v261
      %v279 = vmul.f32 %v240, %v261
      %v280 = vmul.f32 %v241, %v261
      %v281 = vmul.f32 %v242, %v261
      %v282 = vmul.f32 %v243, %v261
      %v283 = vmul.f32 %v244, %v261
      %v284 = vmul.f32 %v245, %v261
      %v285 = vmul.f32 %v246, %v261
      %v286 = vmul.f32 %v247, %v261
      %v287 = vmul.f32 %v248, %v261
      %v288 = vmul.f32 %v249, %v261
      %v289 = vmul.f32 %v250, %v261
      %v290 = vmul.f32 %v251, %v261
      %v291 = vmul.f32 %v252, %v261
      %v292 = vmul.f32 %v253, %v261
      %v293 = vmul.f32 %v254, %v261
      %v294 = vmul.f32 %v255, %v261
      %v295 = vld [vmem:[%s2] sm:$0x1]
      %v297 = vlaneseq
      %v298 = vshrl.u32 %v297, 7
      %v299 = vsub.s32 0, %v298
      %v300 = vrot.slane %v295, %v299
      %v302 = vadd.f32 %v263, %v300
      %v303 = vadd.f32 %v264, %v300
      %v304 = vadd.f32 %v265, %v300
      %v305 = vadd.f32 %v266, %v300
      %v306 = vadd.f32 %v267, %v300
      %v307 = vadd.f32 %v268, %v300
      %v308 = vadd.f32 %v269, %v300
      %v309 = vadd.f32 %v270, %v300
      %v310 = vadd.f32 %v271, %v300
      %v311 = vadd.f32 %v272, %v300
      %v312 = vadd.f32 %v273, %v300
      %v313 = vadd.f32 %v274, %v300
      %v314 = vadd.f32 %v275, %v300
      %v315 = vadd.f32 %v276, %v300
      %v316 = vadd.f32 %v277, %v300
      %v317 = vadd.f32 %v278, %v300
      %v318 = vadd.f32 %v279, %v300
      %v319 = vadd.f32 %v280, %v300
      %v320 = vadd.f32 %v281, %v300
      %v321 = vadd.f32 %v282, %v300
      %v322 = vadd.f32 %v283, %v300
      %v323 = vadd.f32 %v284, %v300
      %v324 = vadd.f32 %v285, %v300
      %v325 = vadd.f32 %v286, %v300
      %v326 = vadd.f32 %v287, %v300
      %v327 = vadd.f32 %v288, %v300
      %v328 = vadd.f32 %v289, %v300
      %v329 = vadd.f32 %v290, %v300
      %v330 = vadd.f32 %v291, %v300
      %v331 = vadd.f32 %v292, %v300
      %v332 = vadd.f32 %v293, %v300
      %v333 = vadd.f32 %v294, %v300
      %v334 = vmax.f32 %v302, 0.0
      %v335 = vmax.f32 %v303, 0.0
      %v336 = vmax.f32 %v304, 0.0
      %v337 = vmax.f32 %v305, 0.0
      %v338 = vmax.f32 %v306, 0.0
      %v339 = vmax.f32 %v307, 0.0
      %v340 = vmax.f32 %v308, 0.0
      %v341 = vmax.f32 %v309, 0.0
      %v342 = vmax.f32 %v310, 0.0
      %v343 = vmax.f32 %v311, 0.0
      %v344 = vmax.f32 %v312, 0.0
      %v345 = vmax.f32 %v313, 0.0
      %v346 = vmax.f32 %v314, 0.0
      %v347 = vmax.f32 %v315, 0.0
      %v348 = vmax.f32 %v316, 0.0
      %v349 = vmax.f32 %v317, 0.0
      %v350 = vmax.f32 %v318, 0.0
      %v351 = vmax.f32 %v319, 0.0
      %v352 = vmax.f32 %v320, 0.0
      %v353 = vmax.f32 %v321, 0.0
      %v354 = vmax.f32 %v322, 0.0
      %v355 = vmax.f32 %v323, 0.0
      %v356 = vmax.f32 %v324, 0.0
      %v357 = vmax.f32 %v325, 0.0
      %v358 = vmax.f32 %v326, 0.0
      %v359 = vmax.f32 %v327, 0.0
      %v360 = vmax.f32 %v328, 0.0
      %v361 = vmax.f32 %v329, 0.0
      %v362 = vmax.f32 %v330, 0.0
      %v363 = vmax.f32 %v331, 0.0
      %v364 = vmax.f32 %v332, 0.0
      %v365 = vmax.f32 %v333, 0.0
      %v366 = vpack.c.bf16 %v335, %v334
      %v367 = vpack.c.bf16 %v337, %v336
      %v368 = vpack.c.bf16 %v339, %v338
      %v369 = vpack.c.bf16 %v341, %v340
      %v370 = vpack.c.bf16 %v343, %v342
      %v371 = vpack.c.bf16 %v345, %v344
      %v372 = vpack.c.bf16 %v347, %v346
      %v373 = vpack.c.bf16 %v349, %v348
      %v374 = vpack.c.bf16 %v351, %v350
      %v375 = vpack.c.bf16 %v353, %v352
      %v376 = vpack.c.bf16 %v355, %v354
      %v377 = vpack.c.bf16 %v357, %v356
      %v378 = vpack.c.bf16 %v359, %v358
      %v379 = vpack.c.bf16 %v361, %v360
      %v380 = vpack.c.bf16 %v363, %v362
      %v381 = vpack.c.bf16 %v365, %v364
      %v382 = vld [vmem:[%s3] sm:$0x3]
      %vm383 = vcmask 31744
      %v385 = vsel %vm383, %v366, 0
      %v388 = vsel %vm383, %v367, 0
      %v391 = vsel %vm383, %v368, 0
      %v394 = vsel %vm383, %v369, 0
      %v397 = vsel %vm383, %v370, 0
      %v400 = vsel %vm383, %v371, 0
      %v403 = vsel %vm383, %v372, 0
      %v406 = vsel %vm383, %v373, 0
      %v409 = vsel %vm383, %v374, 0
      %v412 = vsel %vm383, %v375, 0
      %v415 = vsel %vm383, %v376, 0
      %v418 = vsel %vm383, %v377, 0
      %v421 = vsel %vm383, %v378, 0
      %v424 = vsel %vm383, %v379, 0
      %v427 = vsel %vm383, %v380, 0
      %v430 = vsel %vm383, %v381, 0
      %vm432 = vcmask 1041408
      %v434 = vsel %vm432, %v382, 0
      %436 = vmatprep.subr.bf16.mxu0 0
      %437 = vmatpush1.bf16.msra.mxu0 0
      %438 = vmatprep.subr.bf16.mxu0 0
      %439 = vmatpush1.bf16.msra.mxu0 0
      %440 = vmatprep.subr.bf16.mxu0 0
      %441 = vmatpush1.bf16.msra.mxu0 0
      %442 = vmatprep.subr.bf16.mxu0 0
      %443 = vmatpush1.bf16.msra.mxu0 0
      %444 = vmatprep.subr.bf16.mxu0 0
      %445 = vmatpush1.bf16.msra.mxu0 0
      %446 = vmatprep.subr.bf16.mxu0 0
      %447 = vmatpush1.bf16.msra.mxu0 0
      %448 = vmatprep.subr.bf16.mxu0 0
      %449 = vmatpush1.bf16.msra.mxu0 0
      %450 = vmatprep.subr.bf16.mxu0 0
      %451 = vmatpush1.bf16.msra.mxu0 %v434
      %452 = vmatprep.subr.bf16.mxu0 0
      %453 = vmatpush2.bf16.msra.mxu0 0
      %454 = vmatprep.subr.bf16.mxu0 0
      %455 = vmatpush2.bf16.msra.mxu0 0
      %456 = vmatprep.subr.bf16.mxu0 0
      %457 = vmatpush2.bf16.msra.mxu0 0
      %458 = vmatprep.subr.bf16.mxu0 0
      %459 = vmatpush2.bf16.msra.mxu0 0
      %460 = vmatprep.subr.bf16.mxu0 0
      %461 = vmatpush2.bf16.msra.mxu0 0
      %462 = vmatprep.subr.bf16.mxu0 0
      %463 = vmatpush2.bf16.msra.mxu0 0
      %464 = vmatprep.subr.bf16.mxu0 0
      %465 = vmatpush2.bf16.msra.mxu0 0
      %466 = vmatprep.subr.bf16.mxu0 0
      %467 = vmatpush2.bf16.msra.mxu0 0
      %468 = vmatprep.mubr.bf16.mxu0 0
      %469 = vmatmul.mubr.bf16.gmra.mxu0 %v385
      %v470 = vpop.f32.mrf.mxu0
      %v471 = vadd.f32 0.0, %v470
      %v472 = vpop.f32.mrf.mxu0
      %v473 = vpop.f32.mrf.mxu0
      %v474 = vadd.f32 0.0, %v473
      %v475 = vpop.f32.mrf.mxu0
      %476 = vmatprep.mubr.bf16.mxu0 0
      %477 = vmatmul.mubr.bf16.gmra.mxu0 %v388
      %v478 = vpop.f32.mrf.mxu0
      %v479 = vadd.f32 0.0, %v478
      %v480 = vpop.f32.mrf.mxu0
      %v481 = vpop.f32.mrf.mxu0
      %v482 = vadd.f32 0.0, %v481
      %v483 = vpop.f32.mrf.mxu0
      %484 = vmatprep.mubr.bf16.mxu0 0
      %485 = vmatmul.mubr.bf16.gmra.mxu0 %v391
      %v486 = vpop.f32.mrf.mxu0
      %v487 = vadd.f32 0.0, %v486
      %v488 = vpop.f32.mrf.mxu0
      %v489 = vpop.f32.mrf.mxu0
      %v490 = vadd.f32 0.0, %v489
      %v491 = vpop.f32.mrf.mxu0
      %492 = vmatprep.mubr.bf16.mxu0 0
      %493 = vmatmul.mubr.bf16.gmra.mxu0 %v394
      %v494 = vpop.f32.mrf.mxu0
      %v495 = vadd.f32 0.0, %v494
      %v496 = vpop.f32.mrf.mxu0
      %v497 = vpop.f32.mrf.mxu0
      %v498 = vadd.f32 0.0, %v497
      %v499 = vpop.f32.mrf.mxu0
      %500 = vmatprep.mubr.bf16.mxu0 0
      %501 = vmatmul.mubr.bf16.gmra.mxu0 %v397
      %v502 = vpop.f32.mrf.mxu0
      %v503 = vadd.f32 0.0, %v502
      %v504 = vpop.f32.mrf.mxu0
      %v505 = vpop.f32.mrf.mxu0
      %v506 = vadd.f32 0.0, %v505
      %v507 = vpop.f32.mrf.mxu0
      %508 = vmatprep.mubr.bf16.mxu0 0
      %509 = vmatmul.mubr.bf16.gmra.mxu0 %v400
      %v510 = vpop.f32.mrf.mxu0
      %v511 = vadd.f32 0.0, %v510
      %v512 = vpop.f32.mrf.mxu0
      %v513 = vpop.f32.mrf.mxu0
      %v514 = vadd.f32 0.0, %v513
      %v515 = vpop.f32.mrf.mxu0
      %516 = vmatprep.mubr.bf16.mxu0 0
      %517 = vmatmul.mubr.bf16.gmra.mxu0 %v403
      %v518 = vpop.f32.mrf.mxu0
      %v519 = vadd.f32 0.0, %v518
      %v520 = vpop.f32.mrf.mxu0
      %v521 = vpop.f32.mrf.mxu0
      %v522 = vadd.f32 0.0, %v521
      %v523 = vpop.f32.mrf.mxu0
      %524 = vmatprep.mubr.bf16.mxu0 0
      %525 = vmatmul.mubr.bf16.gmra.mxu0 %v406
      %v526 = vpop.f32.mrf.mxu0
      %v527 = vadd.f32 0.0, %v526
      %v528 = vpop.f32.mrf.mxu0
      %v529 = vpop.f32.mrf.mxu0
      %v530 = vadd.f32 0.0, %v529
      %v531 = vpop.f32.mrf.mxu0
      %532 = vmatprep.mubr.bf16.mxu0 0
      %533 = vmatmul.mubr.bf16.gmra.mxu0 %v409
      %v534 = vpop.f32.mrf.mxu0
      %v535 = vadd.f32 0.0, %v534
      %v536 = vpop.f32.mrf.mxu0
      %v537 = vpop.f32.mrf.mxu0
      %v538 = vadd.f32 0.0, %v537
      %v539 = vpop.f32.mrf.mxu0
      %540 = vmatprep.mubr.bf16.mxu0 0
      %541 = vmatmul.mubr.bf16.gmra.mxu0 %v412
      %v542 = vpop.f32.mrf.mxu0
      %v543 = vadd.f32 0.0, %v542
      %v544 = vpop.f32.mrf.mxu0
      %v545 = vpop.f32.mrf.mxu0
      %v546 = vadd.f32 0.0, %v545
      %v547 = vpop.f32.mrf.mxu0
      %548 = vmatprep.mubr.bf16.mxu0 0
      %549 = vmatmul.mubr.bf16.gmra.mxu0 %v415
      %v550 = vpop.f32.mrf.mxu0
      %v551 = vadd.f32 0.0, %v550
      %v552 = vpop.f32.mrf.mxu0
      %v553 = vpop.f32.mrf.mxu0
      %v554 = vadd.f32 0.0, %v553
      %v555 = vpop.f32.mrf.mxu0
      %556 = vmatprep.mubr.bf16.mxu0 0
      %557 = vmatmul.mubr.bf16.gmra.mxu0 %v418
      %v558 = vpop.f32.mrf.mxu0
      %v559 = vadd.f32 0.0, %v558
      %v560 = vpop.f32.mrf.mxu0
      %v561 = vpop.f32.mrf.mxu0
      %v562 = vadd.f32 0.0, %v561
      %v563 = vpop.f32.mrf.mxu0
      %564 = vmatprep.mubr.bf16.mxu0 0
      %565 = vmatmul.mubr.bf16.gmra.mxu0 %v421
      %v566 = vpop.f32.mrf.mxu0
      %v567 = vadd.f32 0.0, %v566
      %v568 = vpop.f32.mrf.mxu0
      %v569 = vpop.f32.mrf.mxu0
      %v570 = vadd.f32 0.0, %v569
      %v571 = vpop.f32.mrf.mxu0
      %572 = vmatprep.mubr.bf16.mxu0 0
      %573 = vmatmul.mubr.bf16.gmra.mxu0 %v424
      %v574 = vpop.f32.mrf.mxu0
      %v575 = vadd.f32 0.0, %v574
      %v576 = vpop.f32.mrf.mxu0
      %v577 = vpop.f32.mrf.mxu0
      %v578 = vadd.f32 0.0, %v577
      %v579 = vpop.f32.mrf.mxu0
      %580 = vmatprep.mubr.bf16.mxu0 0
      %581 = vmatmul.mubr.bf16.gmra.mxu0 %v427
      %v582 = vpop.f32.mrf.mxu0
      %v583 = vadd.f32 0.0, %v582
      %v584 = vpop.f32.mrf.mxu0
      %v585 = vpop.f32.mrf.mxu0
      %v586 = vadd.f32 0.0, %v585
      %v587 = vpop.f32.mrf.mxu0
      %588 = vmatprep.mubr.bf16.mxu0 0
      %589 = vmatmul.mubr.bf16.gmra.mxu0 %v430
      %v590 = vpop.f32.mrf.mxu0
      %v591 = vadd.f32 0.0, %v590
      %v592 = vpop.f32.mrf.mxu0
      %v593 = vpop.f32.mrf.mxu0
      %v594 = vadd.f32 0.0, %v593
      %v595 = vpop.f32.mrf.mxu0
      %596 = vdwg.mxu0
      %vm597 = vcmask 130048
      %v598 = vsel %vm597, %v471, 0.0
      %v599 = vsel %vm597, %v474, 0.0
      %v600 = vadd.f32 %v598, %v599
      %v601 = vsel %vm597, %v479, 0.0
      %v602 = vadd.f32 %v600, %v601
      %v603 = vsel %vm597, %v482, 0.0
      %v604 = vadd.f32 %v602, %v603
      %v605 = vsel %vm597, %v487, 0.0
      %v606 = vadd.f32 %v604, %v605
      %v607 = vsel %vm597, %v490, 0.0
      %v608 = vadd.f32 %v606, %v607
      %v609 = vsel %vm597, %v495, 0.0
      %v610 = vadd.f32 %v608, %v609
      %v611 = vsel %vm597, %v498, 0.0
      %v612 = vadd.f32 %v610, %v611
      %v613 = vsel %vm597, %v503, 0.0
      %v614 = vadd.f32 %v612, %v613
      %v615 = vsel %vm597, %v506, 0.0
      %v616 = vadd.f32 %v614, %v615
      %v617 = vsel %vm597, %v511, 0.0
      %v618 = vadd.f32 %v616, %v617
      %v619 = vsel %vm597, %v514, 0.0
      %v620 = vadd.f32 %v618, %v619
      %v621 = vsel %vm597, %v519, 0.0
      %v622 = vadd.f32 %v620, %v621
      %v623 = vsel %vm597, %v522, 0.0
      %v624 = vadd.f32 %v622, %v623
      %v625 = vsel %vm597, %v527, 0.0
      %v626 = vadd.f32 %v624, %v625
      %v627 = vsel %vm597, %v530, 0.0
      %v628 = vadd.f32 %v626, %v627
      %v629 = vsel %vm597, %v535, 0.0
      %v630 = vadd.f32 %v628, %v629
      %v631 = vsel %vm597, %v538, 0.0
      %v632 = vadd.f32 %v630, %v631
      %v633 = vsel %vm597, %v543, 0.0
      %v634 = vadd.f32 %v632, %v633
      %v635 = vsel %vm597, %v546, 0.0
      %v636 = vadd.f32 %v634, %v635
      %v637 = vsel %vm597, %v551, 0.0
      %v638 = vadd.f32 %v636, %v637
      %v639 = vsel %vm597, %v554, 0.0
      %v640 = vadd.f32 %v638, %v639
      %v641 = vsel %vm597, %v559, 0.0
      %v642 = vadd.f32 %v640, %v641
      %v643 = vsel %vm597, %v562, 0.0
      %v644 = vadd.f32 %v642, %v643
      %v645 = vsel %vm597, %v567, 0.0
      %v646 = vadd.f32 %v644, %v645
      %v647 = vsel %vm597, %v570, 0.0
      %v648 = vadd.f32 %v646, %v647
      %v649 = vsel %vm597, %v575, 0.0
      %v650 = vadd.f32 %v648, %v649
      %v651 = vsel %vm597, %v578, 0.0
      %v652 = vadd.f32 %v650, %v651
      %v653 = vsel %vm597, %v583, 0.0
      %v654 = vadd.f32 %v652, %v653
      %v655 = vsel %vm597, %v586, 0.0
      %v656 = vadd.f32 %v654, %v655
      %v657 = vsel %vm597, %v591, 0.0
      %v658 = vadd.f32 %v656, %v657
      %v659 = vsel %vm597, %v594, 0.0
      %v660 = vadd.f32 %v658, %v659
      %v661 = vrot.slane %v660, 4
      %v662 = vadd.f32 %v660, %v661
      %v663 = vrot.slane %v662, 2
      %v664 = vadd.f32 %v662, %v663
      %v665 = vrot.slane %v664, 1
      %v666 = vadd.f32 %v664, %v665
      %v667 = vmul.f32 %v471, %v471
      %v668 = vmul.f32 %v474, %v474
      %v669 = vmul.f32 %v479, %v479
      %v670 = vmul.f32 %v482, %v482
      %v671 = vmul.f32 %v487, %v487
      %v672 = vmul.f32 %v490, %v490
      %v673 = vmul.f32 %v495, %v495
      %v674 = vmul.f32 %v498, %v498
      %v675 = vmul.f32 %v503, %v503
      %v676 = vmul.f32 %v506, %v506
      %v677 = vmul.f32 %v511, %v511
      %v678 = vmul.f32 %v514, %v514
      %v679 = vmul.f32 %v519, %v519
      %v680 = vmul.f32 %v522, %v522
      %v681 = vmul.f32 %v527, %v527
      %v682 = vmul.f32 %v530, %v530
      %v683 = vmul.f32 %v535, %v535
      %v684 = vmul.f32 %v538, %v538
      %v685 = vmul.f32 %v543, %v543
      %v686 = vmul.f32 %v546, %v546
      %v687 = vmul.f32 %v551, %v551
      %v688 = vmul.f32 %v554, %v554
      %v689 = vmul.f32 %v559, %v559
      %v690 = vmul.f32 %v562, %v562
      %v691 = vmul.f32 %v567, %v567
      %v692 = vmul.f32 %v570, %v570
      %v693 = vmul.f32 %v575, %v575
      %v694 = vmul.f32 %v578, %v578
      %v695 = vmul.f32 %v583, %v583
      %v696 = vmul.f32 %v586, %v586
      %v697 = vmul.f32 %v591, %v591
      %v698 = vmul.f32 %v594, %v594
      %v699 = vsel %vm597, %v667, 0.0
      %v700 = vsel %vm597, %v668, 0.0
      %v701 = vadd.f32 %v699, %v700
      %v702 = vsel %vm597, %v669, 0.0
      %v703 = vadd.f32 %v701, %v702
      %v704 = vsel %vm597, %v670, 0.0
      %v705 = vadd.f32 %v703, %v704
      %v706 = vsel %vm597, %v671, 0.0
      %v707 = vadd.f32 %v705, %v706
      %v708 = vsel %vm597, %v672, 0.0
      %v709 = vadd.f32 %v707, %v708
      %v710 = vsel %vm597, %v673, 0.0
      %v711 = vadd.f32 %v709, %v710
      %v712 = vsel %vm597, %v674, 0.0
      %v713 = vadd.f32 %v711, %v712
      %v714 = vsel %vm597, %v675, 0.0
      %v715 = vadd.f32 %v713, %v714
      %v716 = vsel %vm597, %v676, 0.0
      %v717 = vadd.f32 %v715, %v716
      %v718 = vsel %vm597, %v677, 0.0
      %v719 = vadd.f32 %v717, %v718
      %v720 = vsel %vm597, %v678, 0.0
      %v721 = vadd.f32 %v719, %v720
      %v722 = vsel %vm597, %v679, 0.0
      %v723 = vadd.f32 %v721, %v722
      %v724 = vsel %vm597, %v680, 0.0
      %v725 = vadd.f32 %v723, %v724
      %v726 = vsel %vm597, %v681, 0.0
      %v727 = vadd.f32 %v725, %v726
      %v728 = vsel %vm597, %v682, 0.0
      %v729 = vadd.f32 %v727, %v728
      %v730 = vsel %vm597, %v683, 0.0
      %v731 = vadd.f32 %v729, %v730
      %v732 = vsel %vm597, %v684, 0.0
      %v733 = vadd.f32 %v731, %v732
      %v734 = vsel %vm597, %v685, 0.0
      %v735 = vadd.f32 %v733, %v734
      %v736 = vsel %vm597, %v686, 0.0
      %v737 = vadd.f32 %v735, %v736
      %v738 = vsel %vm597, %v687, 0.0
      %v739 = vadd.f32 %v737, %v738
      %v740 = vsel %vm597, %v688, 0.0
      %v741 = vadd.f32 %v739, %v740
      %v742 = vsel %vm597, %v689, 0.0
      %v743 = vadd.f32 %v741, %v742
      %v744 = vsel %vm597, %v690, 0.0
      %v745 = vadd.f32 %v743, %v744
      %v746 = vsel %vm597, %v691, 0.0
      %v747 = vadd.f32 %v745, %v746
      %v748 = vsel %vm597, %v692, 0.0
      %v749 = vadd.f32 %v747, %v748
      %v750 = vsel %vm597, %v693, 0.0
      %v751 = vadd.f32 %v749, %v750
      %v752 = vsel %vm597, %v694, 0.0
      %v753 = vadd.f32 %v751, %v752
      %v754 = vsel %vm597, %v695, 0.0
      %v755 = vadd.f32 %v753, %v754
      %v756 = vsel %vm597, %v696, 0.0
      %v757 = vadd.f32 %v755, %v756
      %v758 = vsel %vm597, %v697, 0.0
      %v759 = vadd.f32 %v757, %v758
      %v760 = vsel %vm597, %v698, 0.0
      %v761 = vadd.f32 %v759, %v760
      %v762 = vrot.slane %v761, 4
      %v763 = vadd.f32 %v761, %v762
      %v764 = vrot.slane %v763, 2
      %v765 = vadd.f32 %v763, %v764
      %v766 = vrot.slane %v765, 1
      %v767 = vadd.f32 %v765, %v766
      %p768 = scmp.eq.s32.totalorder %s17, 0
      // Predicated region
      $region37: #{dense_block_pallas.4} parent=35 // pred_check
        %p769 = pneg %p768
      $region38: #{dense_block_pallas.4} parent=35 // pred_check_branch
        %771 = sbr.rel (%p769) target = $region40
      $region39: #{dense_block_pallas.4} parent=35 // pred_region
        %vm772 = vcmask 123904
        %773 = vst.msk [vmem:[%s5] sm:$0x3] %vm772, 0.0
      $region40: #{dense_block_pallas.4} parent=35 // pred_fallthru
        _
      %v774 = vld [vmem:[%s5] sm:$0x3]
      %vm775 = vcmask 1040384
      %v776 = vsel %vm775, %v666, %v767
      %v777 = vadd.f32 %v774, %v776
      %vm778 = vcmask 123904
      %779 = vst.msk [vmem:[%s5] sm:$0x3] %vm778, %v777
      %v780 = vpack.c.bf16 %v474, %v471
      %v781 = vpack.c.bf16 %v482, %v479
      %v782 = vpack.c.bf16 %v490, %v487
      %v783 = vpack.c.bf16 %v498, %v495
      %v784 = vpack.c.bf16 %v506, %v503
      %v785 = vpack.c.bf16 %v514, %v511
      %v786 = vpack.c.bf16 %v522, %v519
      %v787 = vpack.c.bf16 %v530, %v527
      %v788 = vpack.c.bf16 %v538, %v535
      %v789 = vpack.c.bf16 %v546, %v543
      %v790 = vpack.c.bf16 %v554, %v551
      %v791 = vpack.c.bf16 %v562, %v559
      %v792 = vpack.c.bf16 %v570, %v567
      %v793 = vpack.c.bf16 %v578, %v575
      %v794 = vpack.c.bf16 %v586, %v583
      %v795 = vpack.c.bf16 %v594, %v591
      %v812 = vunpack.c.l.b16 %v780
      %v813 = vunpack.c.h.b16 %v780
      %v814 = vunpack.c.l.b16 %v781
      %v815 = vunpack.c.h.b16 %v781
      %v816 = vunpack.c.l.b16 %v782
      %v817 = vunpack.c.h.b16 %v782
      %v818 = vunpack.c.l.b16 %v783
      %v819 = vunpack.c.h.b16 %v783
      %v820 = vunpack.c.l.b16 %v784
      %v821 = vunpack.c.h.b16 %v784
      %v822 = vunpack.c.l.b16 %v785
      %v823 = vunpack.c.h.b16 %v785
      %v824 = vunpack.c.l.b16 %v786
      %v825 = vunpack.c.h.b16 %v786
      %v826 = vunpack.c.l.b16 %v787
      %v827 = vunpack.c.h.b16 %v787
      %v828 = vunpack.c.l.b16 %v788
      %v829 = vunpack.c.h.b16 %v788
      %v830 = vunpack.c.l.b16 %v789
      %v831 = vunpack.c.h.b16 %v789
      %v832 = vunpack.c.l.b16 %v790
      %v833 = vunpack.c.h.b16 %v790
      %v834 = vunpack.c.l.b16 %v791
      %v835 = vunpack.c.h.b16 %v791
      %v836 = vunpack.c.l.b16 %v792
      %v837 = vunpack.c.h.b16 %v792
      %v838 = vunpack.c.l.b16 %v793
      %v839 = vunpack.c.h.b16 %v793
      %v840 = vunpack.c.l.b16 %v794
      %v841 = vunpack.c.h.b16 %v794
      %v842 = vunpack.c.l.b16 %v795
      %v843 = vunpack.c.h.b16 %v795
      %v844 = vpack.c.b16 %v812, %v812
      %v845 = vpack.c.b16 %v813, %v813
      %v846 = vpack.c.b16 %v814, %v814
      %v847 = vpack.c.b16 %v815, %v815
      %v848 = vpack.c.b16 %v816, %v816
      %v849 = vpack.c.b16 %v817, %v817
      %v850 = vpack.c.b16 %v818, %v818
      %v851 = vpack.c.b16 %v819, %v819
      %v852 = vpack.c.b16 %v820, %v820
      %v853 = vpack.c.b16 %v821, %v821
      %v854 = vpack.c.b16 %v822, %v822
      %v855 = vpack.c.b16 %v823, %v823
      %v856 = vpack.c.b16 %v824, %v824
      %v857 = vpack.c.b16 %v825, %v825
      %v858 = vpack.c.b16 %v826, %v826
      %v859 = vpack.c.b16 %v827, %v827
      %v860 = vpack.c.b16 %v828, %v828
      %v861 = vpack.c.b16 %v829, %v829
      %v862 = vpack.c.b16 %v830, %v830
      %v863 = vpack.c.b16 %v831, %v831
      %v864 = vpack.c.b16 %v832, %v832
      %v865 = vpack.c.b16 %v833, %v833
      %v866 = vpack.c.b16 %v834, %v834
      %v867 = vpack.c.b16 %v835, %v835
      %v868 = vpack.c.b16 %v836, %v836
      %v869 = vpack.c.b16 %v837, %v837
      %v870 = vpack.c.b16 %v838, %v838
      %v871 = vpack.c.b16 %v839, %v839
      %v872 = vpack.c.b16 %v840, %v840
      %v873 = vpack.c.b16 %v841, %v841
      %v874 = vpack.c.b16 %v842, %v842
      %v875 = vpack.c.b16 %v843, %v843
      %vm908 = vcmask 125952
      %909 = vst.msk [vmem:[%s222] sm:$0xf] %vm908, %v844
      %910 = vst.msk [vmem:[%s222 + $0x4] sm:$0xf] %vm908, %v845
      %911 = vst.msk [vmem:[%s222 + $0x8] sm:$0xf] %vm908, %v846
      %912 = vst.msk [vmem:[%s222 + $0xc] sm:$0xf] %vm908, %v847
      %913 = vst.msk [vmem:[%s222 + $0x10] sm:$0xf] %vm908, %v848
      %914 = vst.msk [vmem:[%s222 + $0x14] sm:$0xf] %vm908, %v849
      %915 = vst.msk [vmem:[%s222 + $0x18] sm:$0xf] %vm908, %v850
      %916 = vst.msk [vmem:[%s222 + $0x1c] sm:$0xf] %vm908, %v851
      %917 = vst.msk [vmem:[%s222 + $0x20] sm:$0xf] %vm908, %v852
      %918 = vst.msk [vmem:[%s222 + $0x24] sm:$0xf] %vm908, %v853
      %919 = vst.msk [vmem:[%s222 + $0x28] sm:$0xf] %vm908, %v854
      %920 = vst.msk [vmem:[%s222 + $0x2c] sm:$0xf] %vm908, %v855
      %921 = vst.msk [vmem:[%s222 + $0x30] sm:$0xf] %vm908, %v856
      %922 = vst.msk [vmem:[%s222 + $0x34] sm:$0xf] %vm908, %v857
      %923 = vst.msk [vmem:[%s222 + $0x38] sm:$0xf] %vm908, %v858
      %924 = vst.msk [vmem:[%s222 + $0x3c] sm:$0xf] %vm908, %v859
      %925 = vst.msk [vmem:[%s222 + $0x40] sm:$0xf] %vm908, %v860
      %926 = vst.msk [vmem:[%s222 + $0x44] sm:$0xf] %vm908, %v861
      %927 = vst.msk [vmem:[%s222 + $0x48] sm:$0xf] %vm908, %v862
      %928 = vst.msk [vmem:[%s222 + $0x4c] sm:$0xf] %vm908, %v863
      %929 = vst.msk [vmem:[%s222 + $0x50] sm:$0xf] %vm908, %v864
      %930 = vst.msk [vmem:[%s222 + $0x54] sm:$0xf] %vm908, %v865
      %931 = vst.msk [vmem:[%s222 + $0x58] sm:$0xf] %vm908, %v866
      %932 = vst.msk [vmem:[%s222 + $0x5c] sm:$0xf] %vm908, %v867
      %933 = vst.msk [vmem:[%s222 + $0x60] sm:$0xf] %vm908, %v868
      %934 = vst.msk [vmem:[%s222 + $0x64] sm:$0xf] %vm908, %v869
      %935 = vst.msk [vmem:[%s222 + $0x68] sm:$0xf] %vm908, %v870
      %936 = vst.msk [vmem:[%s222 + $0x6c] sm:$0xf] %vm908, %v871
      %937 = vst.msk [vmem:[%s222 + $0x70] sm:$0xf] %vm908, %v872
      %938 = vst.msk [vmem:[%s222 + $0x74] sm:$0xf] %vm908, %v873
      %939 = vst.msk [vmem:[%s222 + $0x78] sm:$0xf] %vm908, %v874
      %940 = vst.msk [vmem:[%s222 + $0x7c] sm:$0xf] %vm908, %v875
      %p941 = scmp.lt.s32.totalorder %s17, 1
      %s942 = scalar_select %p941, %s17, 1
      %s943 = smul.addr %s942, 32
      %s944 = smul.addr %s943, 4
      %s945 = scalar_lea.vmem %s4, %s944
      // Predicated region
      $region41: #{dense_block_pallas.4} parent=35 // pred_check
        %p946 = pneg %p124
      $region42: #{dense_block_pallas.4} parent=35 // pred_check_branch
        %948 = sbr.rel (%p946) target = $region44
      $region43: #{dense_block_pallas.4} parent=35 // pred_region
        _
      $region44: #{dense_block_pallas.4} parent=35 // pred_fallthru
        _
      // Predicated region
      $region45: #{dense_block_pallas.4} parent=35 // pred_check
        %p949 = pneg %p145
      $region46: #{dense_block_pallas.4} parent=35 // pred_check_branch
        %951 = sbr.rel (%p949) target = $region48
      $region47: #{dense_block_pallas.4} parent=35 // pred_region
        _
      $region48: #{dense_block_pallas.4} parent=35 // pred_fallthru
        _
      // Predicated region
      $region49: #{dense_block_pallas.4} parent=35 // pred_check
        %p952 = pneg %p145
      $region50: #{dense_block_pallas.4} parent=35 // pred_check_branch
        %954 = sbr.rel (%p952) target = $region52
      $region51: #{dense_block_pallas.4} parent=35 // pred_region
        _
      $region52: #{dense_block_pallas.4} parent=35 // pred_fallthru
        _
    $region36: #{dense_block_pallas.4} parent=5 // pred_fallthru
      _
    %p955 = scmp.le.s32.totalorder 2, %s12
    // Predicated region
    $region53: #{dense_block_pallas.4} parent=5 // pred_check
      %p956 = pneg %p955
    $region54: #{dense_block_pallas.4} parent=5 // pred_check_branch
      %958 = sbr.rel (%p956) target = $region56
    $region55: #{dense_block_pallas.4} parent=5 // pred_region
      %s959 = ssub.s32 %s12, 2
      // Predicated region
      $region57: #{dense_block_pallas.4} parent=55 // pred_check
        %p960 = pneg %p130
      $region58: #{dense_block_pallas.4} parent=55 // pred_check_branch
        %962 = sbr.rel (%p960) target = $region60
      $region59: #{dense_block_pallas.4} parent=55 // pred_region
        %p963 = scmp.lt.s32.totalorder %s18, 1
        %s964 = scalar_select %p963, %s18, 1
        %s965 = smul.addr %s964, 32
        %s966 = smul.addr %s965, 4
        %s967 = scalar_lea.vmem %s4, %s966
      $region60: #{dense_block_pallas.4} parent=55 // pred_fallthru
        _
    $region56: #{dense_block_pallas.4} parent=5 // pred_fallthru
      _
  $region6: #{dense_block_pallas.4} parent=0 // loop_footer
    %s16 = sadd.s32 1, %s12
  $region7: #{dense_block_pallas.4} parent=0 // loop_footer_branch
    %11 = sbr.rel target = $region3
  $region8: #{dense_block_pallas.4} parent=0 // loop_exit
    _

// kernel: dense_block_pallas.5
$region0: #{dense_block_pallas.5}
  #allocation0 [shape = 'u32[]', space=smem, size = 0x4, offset = 0x4, fixed_abs, tag = 'smem constant byte address 0x4 - core index']
  #allocation1 [shape = 'u32[144,128]{1,0:T(1,128)}', space=vmem, size = 0x12000, scoped, tag = 'internal scratch']
  %s0 = inlined_call_operand.vmem [shape: bf16[2,16,16,16], index: 0, kind: input, shape index: {}]
  %s1 = inlined_call_operand.vmem [shape: f32[1,16], index: 1, kind: input, shape index: {}]
  %s2 = inlined_call_operand.vmem [shape: f32[1,16], index: 2, kind: input, shape index: {}]
  %s3 = inlined_call_operand.vmem [shape: bf16[3,48,4], index: 3, kind: input, shape index: {}]
  %s4 = inlined_call_operand.vmem [shape: f32[2,16,16,4], index: 4, kind: output, shape index: {}]
  %s5 = sld [smem:[#allocation0]]
  $region49: #{dense_block_pallas.5} parent=0
    _
  %s7 = ssub.s32 1, %s5
  %s8 = scalar_select 0, %s7, %s5
  loop: start=0, step=1, limit=4
  $region2: #{dense_block_pallas.5} parent=0 // loop_pre_header
    _
  $region3: #{dense_block_pallas.5} parent=0 // loop_header
    %s10 = sphi 0, %s14
    %p11 = scmp.ge.s32.totalorder %s10, 4
    %s20 = sphi 0, %s22
    %s23 = sphi 0, %s20
    %s24 = sphi 0, %s23
    %s40 = sphi 0, %s24
    %s44 = sphi 0, %s44
    %s46 = sphi 0, %s44
    %s47 = sphi 0, %s46
    %s61 = sphi 0, %s47
    %s65 = sphi 0, %s65
    %s67 = sphi 0, %s65
    %s68 = sphi 0, %s67
    %s82 = sphi 0, %s68
    %s86 = sphi 0, %s86
    %s88 = sphi 0, %s86
    %s89 = sphi 0, %s88
    %s103 = sphi 0, %s89
    %s109 = sphi 0, %s111
    %s112 = sphi 0, %s109
    %s113 = sphi 0, %s112
    %s129 = sphi 0, %s113
  $region4: #{dense_block_pallas.5} parent=0 // loop_header_branch
    %13 = sbr.rel (%p11) target = $region8
  $region5: #{dense_block_pallas.5} parent=0 // loop_body
    %s15 = ssub.s32 %s10, 1
    %s16 = ssub.s32 %s10, 2
    %s17 = sadd.s32 %s10, 1
    %s18 = ssub.s32 %s10, %s17
    %p19 = scmp.eq.s32.totalorder %s18, 0
    %s21 = sadd.s32 %s20, 1
    %s22 = scalar_select %p19, %s20, %s21
    %p25 = pneg %p19
    %p26 = scmp.eq.s32.totalorder %s10, 1
    %p27 = por %p25, %p26
    %p28 = scmp.ne.s32.totalorder %s20, %s23
    %p29 = scmp.eq.s32.totalorder %s10, 0
    %p30 = por %p28, %p29
    %p31 = scmp.ne.s32.totalorder %s20, %s23
    %p32 = scmp.eq.s32.totalorder %s15, 1
    %p33 = por %p31, %p32
    %p34 = scmp.ne.s32.totalorder %s23, %s24
    %p35 = scmp.eq.s32.totalorder %s15, 0
    %p36 = por %p34, %p35
    %p37 = scmp.ne.s32.totalorder %s23, %s24
    %p38 = scmp.eq.s32.totalorder %s16, 1
    %p39 = por %p37, %p38
    %p41 = scmp.ne.s32.totalorder %s24, %s40
    %p42 = scmp.eq.s32.totalorder %s16, 0
    %p43 = por %p41, %p42
    %s45 = sadd.s32 %s44, 1
    %p48 = scmp.eq.s32.totalorder %s10, 1
    %p49 = scmp.ne.s32.totalorder %s44, %s46
    %p50 = scmp.eq.s32.totalorder %s10, 0
    %p51 = por %p49, %p50
    %p52 = scmp.ne.s32.totalorder %s44, %s46
    %p53 = scmp.eq.s32.totalorder %s15, 1
    %p54 = por %p52, %p53
    %p55 = scmp.ne.s32.totalorder %s46, %s47
    %p56 = scmp.eq.s32.totalorder %s15, 0
    %p57 = por %p55, %p56
    %p58 = scmp.ne.s32.totalorder %s46, %s47
    %p59 = scmp.eq.s32.totalorder %s16, 1
    %p60 = por %p58, %p59
    %p62 = scmp.ne.s32.totalorder %s47, %s61
    %p63 = scmp.eq.s32.totalorder %s16, 0
    %p64 = por %p62, %p63
    %s66 = sadd.s32 %s65, 1
    %p69 = scmp.eq.s32.totalorder %s10, 1
    %p70 = scmp.ne.s32.totalorder %s65, %s67
    %p71 = scmp.eq.s32.totalorder %s10, 0
    %p72 = por %p70, %p71
    %p73 = scmp.ne.s32.totalorder %s65, %s67
    %p74 = scmp.eq.s32.totalorder %s15, 1
    %p75 = por %p73, %p74
    %p76 = scmp.ne.s32.totalorder %s67, %s68
    %p77 = scmp.eq.s32.totalorder %s15, 0
    %p78 = por %p76, %p77
    %p79 = scmp.ne.s32.totalorder %s67, %s68
    %p80 = scmp.eq.s32.totalorder %s16, 1
    %p81 = por %p79, %p80
    %p83 = scmp.ne.s32.totalorder %s68, %s82
    %p84 = scmp.eq.s32.totalorder %s16, 0
    %p85 = por %p83, %p84
    %s87 = sadd.s32 %s86, 1
    %p90 = scmp.eq.s32.totalorder %s10, 1
    %p91 = scmp.ne.s32.totalorder %s86, %s88
    %p92 = scmp.eq.s32.totalorder %s10, 0
    %p93 = por %p91, %p92
    %p94 = scmp.ne.s32.totalorder %s86, %s88
    %p95 = scmp.eq.s32.totalorder %s15, 1
    %p96 = por %p94, %p95
    %p97 = scmp.ne.s32.totalorder %s88, %s89
    %p98 = scmp.eq.s32.totalorder %s15, 0
    %p99 = por %p97, %p98
    %p100 = scmp.ne.s32.totalorder %s88, %s89
    %p101 = scmp.eq.s32.totalorder %s16, 1
    %p102 = por %p100, %p101
    %p104 = scmp.ne.s32.totalorder %s89, %s103
    %p105 = scmp.eq.s32.totalorder %s16, 0
    %p106 = por %p104, %p105
    %s107 = ssub.s32 %s10, %s17
    %p108 = scmp.eq.s32.totalorder %s107, 0
    %s110 = sadd.s32 %s109, 1
    %s111 = scalar_select %p108, %s109, %s110
    %p114 = pneg %p108
    %p115 = scmp.eq.s32.totalorder %s10, 1
    %p116 = por %p114, %p115
    %p117 = scmp.ne.s32.totalorder %s109, %s112
    %p118 = scmp.eq.s32.totalorder %s10, 0
    %p119 = por %p117, %p118
    %p120 = scmp.ne.s32.totalorder %s109, %s112
    %p121 = scmp.eq.s32.totalorder %s15, 1
    %p122 = por %p120, %p121
    %p123 = scmp.ne.s32.totalorder %s112, %s113
    %p124 = scmp.eq.s32.totalorder %s15, 0
    %p125 = por %p123, %p124
    %p126 = scmp.ne.s32.totalorder %s112, %s113
    %p127 = scmp.eq.s32.totalorder %s16, 1
    %p128 = por %p126, %p127
    %p130 = scmp.ne.s32.totalorder %s113, %s129
    %p131 = scmp.eq.s32.totalorder %s16, 0
    %p132 = por %p130, %p131
    %p133 = scmp.le.s32.totalorder 1, %s10
    %p134 = scmp.lt.s32.totalorder %s10, 3
    %p135 = pnand %p133, %p134
    %p136 = pneg %p135
    // Predicated region
    $region9: #{dense_block_pallas.5} parent=5 // pred_check
      _
    $region10: #{dense_block_pallas.5} parent=5 // pred_check_branch
      %138 = sbr.rel (%p135) target = $region12
    $region11: #{dense_block_pallas.5} parent=5 // pred_region
      %s139 = ssub.s32 %s10, 1
      // Predicated region
      $region13: #{dense_block_pallas.5} parent=11 // pred_check
        %p140 = pneg %p57
      $region14: #{dense_block_pallas.5} parent=11 // pred_check_branch
        %142 = sbr.rel (%p140) target = $region16
      $region15: #{dense_block_pallas.5} parent=11 // pred_region
        _
      $region16: #{dense_block_pallas.5} parent=11 // pred_fallthru
        _
      // Predicated region
      $region17: #{dense_block_pallas.5} parent=11 // pred_check
        %p143 = pneg %p78
      $region18: #{dense_block_pallas.5} parent=11 // pred_check_branch
        %145 = sbr.rel (%p143) target = $region20
      $region19: #{dense_block_pallas.5} parent=11 // pred_region
        _
      $region20: #{dense_block_pallas.5} parent=11 // pred_fallthru
        _
      // Predicated region
      $region21: #{dense_block_pallas.5} parent=11 // pred_check
        %p146 = pneg %p99
      $region22: #{dense_block_pallas.5} parent=11 // pred_check_branch
        %148 = sbr.rel (%p146) target = $region24
      $region23: #{dense_block_pallas.5} parent=11 // pred_region
        _
      $region24: #{dense_block_pallas.5} parent=11 // pred_fallthru
        _
    $region12: #{dense_block_pallas.5} parent=5 // pred_fallthru
      _
    %p149 = scmp.lt.s32.totalorder %s10, 2
    // Predicated region
    $region25: #{dense_block_pallas.5} parent=5 // pred_check
      %p150 = pneg %p149
    $region26: #{dense_block_pallas.5} parent=5 // pred_check_branch
      %152 = sbr.rel (%p150) target = $region28
    $region27: #{dense_block_pallas.5} parent=5 // pred_region
      // Predicated region
      $region29: #{dense_block_pallas.5} parent=27 // pred_check
        %p153 = pneg %p30
      $region30: #{dense_block_pallas.5} parent=27 // pred_check_branch
        %155 = sbr.rel (%p153) target = $region32
      $region31: #{dense_block_pallas.5} parent=27 // pred_region
        %p156 = scmp.lt.s32.totalorder %s10, 1
        %s157 = scalar_select %p156, %s10, 1
        %s158 = smul.addr %s157, 32
        %s159 = smul.addr %s158, 4
        %s160 = scalar_lea.vmem %s0, %s159
      $region32: #{dense_block_pallas.5} parent=27 // pred_fallthru
        _
    $region28: #{dense_block_pallas.5} parent=5 // pred_fallthru
      _
    %p161 = scmp.le.s32.totalorder 1, %s10
    %p162 = scmp.lt.s32.totalorder %s10, 3
    %p163 = pnand %p161, %p162
    %p164 = pneg %p163
    // Predicated region
    $region33: #{dense_block_pallas.5} parent=5 // pred_check
      _
    $region34: #{dense_block_pallas.5} parent=5 // pred_check_branch
      %166 = sbr.rel (%p163) target = $region36
    $region35: #{dense_block_pallas.5} parent=5 // pred_region
      %s167 = ssub.s32 %s10, 1
      %p168 = scmp.lt.s32.totalorder %s15, 1
      %s169 = scalar_select %p168, %s15, 1
      %s170 = smul.addr %s169, 32
      %s171 = smul.addr %s170, 4
      %s172 = scalar_lea.vmem %s0, %s171
      %p173 = pneg %p36
      %p174 = pneg %p33
      %p175 = pneg %p57
      %p176 = pneg %p54
      %p177 = pneg %p78
      %p178 = pneg %p75
      %p179 = pneg %p99
      %p180 = pneg %p96
      %p181 = pneg %p125
      %p182 = pneg %p122
      %p183 = scmp.lt.s32.totalorder %s15, 1
      %s184 = scalar_select %p183, %s15, 1
      %s185 = smul.addr %s184, 32
      %s186 = smul.addr %s185, 8
      %s187 = scalar_lea.vmem %s4, %s186
      %p188 = scmp.lt.s32.totalorder %s15, 1
      %s189 = scalar_select %p188, %s15, 1
      %s190 = smul.addr %s189, 32
      %s191 = smul.addr %s190, 4
      %s192 = scalar_lea.vmem %s0, %s191
      %p193 = scmp.lt.s32.totalorder %s15, 1
      %s194 = scalar_select %p193, %s15, 1
      %s195 = smul.addr %s194, 32
      %s196 = smul.addr %s195, 8
      %s197 = scalar_lea.vmem %s4, %s196
      %v199 = vld [vmem:[%s192] sm:$0xf]
      %v200 = vld [vmem:[%s192 + $0x4] sm:$0xf]
      %v201 = vld [vmem:[%s192 + $0x8] sm:$0xf]
      %v202 = vld [vmem:[%s192 + $0xc] sm:$0xf]
      %v203 = vld [vmem:[%s192 + $0x10] sm:$0xf]
      %v204 = vld [vmem:[%s192 + $0x14] sm:$0xf]
      %v205 = vld [vmem:[%s192 + $0x18] sm:$0xf]
      %v206 = vld [vmem:[%s192 + $0x1c] sm:$0xf]
      %v207 = vld [vmem:[%s192 + $0x20] sm:$0xf]
      %v208 = vld [vmem:[%s192 + $0x24] sm:$0xf]
      %v209 = vld [vmem:[%s192 + $0x28] sm:$0xf]
      %v210 = vld [vmem:[%s192 + $0x2c] sm:$0xf]
      %v211 = vld [vmem:[%s192 + $0x30] sm:$0xf]
      %v212 = vld [vmem:[%s192 + $0x34] sm:$0xf]
      %v213 = vld [vmem:[%s192 + $0x38] sm:$0xf]
      %v214 = vld [vmem:[%s192 + $0x3c] sm:$0xf]
      %v215 = vld [vmem:[%s192 + $0x40] sm:$0xf]
      %v216 = vld [vmem:[%s192 + $0x44] sm:$0xf]
      %v217 = vld [vmem:[%s192 + $0x48] sm:$0xf]
      %v218 = vld [vmem:[%s192 + $0x4c] sm:$0xf]
      %v219 = vld [vmem:[%s192 + $0x50] sm:$0xf]
      %v220 = vld [vmem:[%s192 + $0x54] sm:$0xf]
      %v221 = vld [vmem:[%s192 + $0x58] sm:$0xf]
      %v222 = vld [vmem:[%s192 + $0x5c] sm:$0xf]
      %v223 = vld [vmem:[%s192 + $0x60] sm:$0xf]
      %v224 = vld [vmem:[%s192 + $0x64] sm:$0xf]
      %v225 = vld [vmem:[%s192 + $0x68] sm:$0xf]
      %v226 = vld [vmem:[%s192 + $0x6c] sm:$0xf]
      %v227 = vld [vmem:[%s192 + $0x70] sm:$0xf]
      %v228 = vld [vmem:[%s192 + $0x74] sm:$0xf]
      %v229 = vld [vmem:[%s192 + $0x78] sm:$0xf]
      %v230 = vld [vmem:[%s192 + $0x7c] sm:$0xf]
      %v231 = vunpack.c.l.bf16 %v199
      %v232 = vunpack.c.l.bf16 %v200
      %v233 = vunpack.c.l.bf16 %v201
      %v234 = vunpack.c.l.bf16 %v202
      %v235 = vunpack.c.l.bf16 %v203
      %v236 = vunpack.c.l.bf16 %v204
      %v237 = vunpack.c.l.bf16 %v205
      %v238 = vunpack.c.l.bf16 %v206
      %v239 = vunpack.c.l.bf16 %v207
      %v240 = vunpack.c.l.bf16 %v208
      %v241 = vunpack.c.l.bf16 %v209
      %v242 = vunpack.c.l.bf16 %v210
      %v243 = vunpack.c.l.bf16 %v211
      %v244 = vunpack.c.l.bf16 %v212
      %v245 = vunpack.c.l.bf16 %v213
      %v246 = vunpack.c.l.bf16 %v214
      %v247 = vunpack.c.l.bf16 %v215
      %v248 = vunpack.c.l.bf16 %v216
      %v249 = vunpack.c.l.bf16 %v217
      %v250 = vunpack.c.l.bf16 %v218
      %v251 = vunpack.c.l.bf16 %v219
      %v252 = vunpack.c.l.bf16 %v220
      %v253 = vunpack.c.l.bf16 %v221
      %v254 = vunpack.c.l.bf16 %v222
      %v255 = vunpack.c.l.bf16 %v223
      %v256 = vunpack.c.l.bf16 %v224
      %v257 = vunpack.c.l.bf16 %v225
      %v258 = vunpack.c.l.bf16 %v226
      %v259 = vunpack.c.l.bf16 %v227
      %v260 = vunpack.c.l.bf16 %v228
      %v261 = vunpack.c.l.bf16 %v229
      %v262 = vunpack.c.l.bf16 %v230
      %v263 = vld [vmem:[%s1] sm:$0x1]
      %v265 = vlaneseq
      %v266 = vshrl.u32 %v265, 7
      %v267 = vsub.s32 0, %v266
      %v268 = vrot.slane %v263, %v267
      %v270 = vmul.f32 %v231, %v268
      %v271 = vmul.f32 %v232, %v268
      %v272 = vmul.f32 %v233, %v268
      %v273 = vmul.f32 %v234, %v268
      %v274 = vmul.f32 %v235, %v268
      %v275 = vmul.f32 %v236, %v268
      %v276 = vmul.f32 %v237, %v268
      %v277 = vmul.f32 %v238, %v268
      %v278 = vmul.f32 %v239, %v268
      %v279 = vmul.f32 %v240, %v268
      %v280 = vmul.f32 %v241, %v268
      %v281 = vmul.f32 %v242, %v268
      %v282 = vmul.f32 %v243, %v268
      %v283 = vmul.f32 %v244, %v268
      %v284 = vmul.f32 %v245, %v268
      %v285 = vmul.f32 %v246, %v268
      %v286 = vmul.f32 %v247, %v268
      %v287 = vmul.f32 %v248, %v268
      %v288 = vmul.f32 %v249, %v268
      %v289 = vmul.f32 %v250, %v268
      %v290 = vmul.f32 %v251, %v268
      %v291 = vmul.f32 %v252, %v268
      %v292 = vmul.f32 %v253, %v268
      %v293 = vmul.f32 %v254, %v268
      %v294 = vmul.f32 %v255, %v268
      %v295 = vmul.f32 %v256, %v268
      %v296 = vmul.f32 %v257, %v268
      %v297 = vmul.f32 %v258, %v268
      %v298 = vmul.f32 %v259, %v268
      %v299 = vmul.f32 %v260, %v268
      %v300 = vmul.f32 %v261, %v268
      %v301 = vmul.f32 %v262, %v268
      %v302 = vld [vmem:[%s2] sm:$0x1]
      %v304 = vlaneseq
      %v305 = vshrl.u32 %v304, 7
      %v306 = vsub.s32 0, %v305
      %v307 = vrot.slane %v302, %v306
      %v309 = vadd.f32 %v270, %v307
      %v310 = vadd.f32 %v271, %v307
      %v311 = vadd.f32 %v272, %v307
      %v312 = vadd.f32 %v273, %v307
      %v313 = vadd.f32 %v274, %v307
      %v314 = vadd.f32 %v275, %v307
      %v315 = vadd.f32 %v276, %v307
      %v316 = vadd.f32 %v277, %v307
      %v317 = vadd.f32 %v278, %v307
      %v318 = vadd.f32 %v279, %v307
      %v319 = vadd.f32 %v280, %v307
      %v320 = vadd.f32 %v281, %v307
      %v321 = vadd.f32 %v282, %v307
      %v322 = vadd.f32 %v283, %v307
      %v323 = vadd.f32 %v284, %v307
      %v324 = vadd.f32 %v285, %v307
      %v325 = vadd.f32 %v286, %v307
      %v326 = vadd.f32 %v287, %v307
      %v327 = vadd.f32 %v288, %v307
      %v328 = vadd.f32 %v289, %v307
      %v329 = vadd.f32 %v290, %v307
      %v330 = vadd.f32 %v291, %v307
      %v331 = vadd.f32 %v292, %v307
      %v332 = vadd.f32 %v293, %v307
      %v333 = vadd.f32 %v294, %v307
      %v334 = vadd.f32 %v295, %v307
      %v335 = vadd.f32 %v296, %v307
      %v336 = vadd.f32 %v297, %v307
      %v337 = vadd.f32 %v298, %v307
      %v338 = vadd.f32 %v299, %v307
      %v339 = vadd.f32 %v300, %v307
      %v340 = vadd.f32 %v301, %v307
      %v341 = vmax.f32 %v309, 0.0
      %v342 = vmax.f32 %v310, 0.0
      %v343 = vmax.f32 %v311, 0.0
      %v344 = vmax.f32 %v312, 0.0
      %v345 = vmax.f32 %v313, 0.0
      %v346 = vmax.f32 %v314, 0.0
      %v347 = vmax.f32 %v315, 0.0
      %v348 = vmax.f32 %v316, 0.0
      %v349 = vmax.f32 %v317, 0.0
      %v350 = vmax.f32 %v318, 0.0
      %v351 = vmax.f32 %v319, 0.0
      %v352 = vmax.f32 %v320, 0.0
      %v353 = vmax.f32 %v321, 0.0
      %v354 = vmax.f32 %v322, 0.0
      %v355 = vmax.f32 %v323, 0.0
      %v356 = vmax.f32 %v324, 0.0
      %v357 = vmax.f32 %v325, 0.0
      %v358 = vmax.f32 %v326, 0.0
      %v359 = vmax.f32 %v327, 0.0
      %v360 = vmax.f32 %v328, 0.0
      %v361 = vmax.f32 %v329, 0.0
      %v362 = vmax.f32 %v330, 0.0
      %v363 = vmax.f32 %v331, 0.0
      %v364 = vmax.f32 %v332, 0.0
      %v365 = vmax.f32 %v333, 0.0
      %v366 = vmax.f32 %v334, 0.0
      %v367 = vmax.f32 %v335, 0.0
      %v368 = vmax.f32 %v336, 0.0
      %v369 = vmax.f32 %v337, 0.0
      %v370 = vmax.f32 %v338, 0.0
      %v371 = vmax.f32 %v339, 0.0
      %v372 = vmax.f32 %v340, 0.0
      %v373 = vpack.c.bf16 %v342, %v341
      %v374 = vpack.c.bf16 %v344, %v343
      %v375 = vpack.c.bf16 %v346, %v345
      %v376 = vpack.c.bf16 %v348, %v347
      %v377 = vpack.c.bf16 %v350, %v349
      %v378 = vpack.c.bf16 %v352, %v351
      %v379 = vpack.c.bf16 %v354, %v353
      %v380 = vpack.c.bf16 %v356, %v355
      %v381 = vpack.c.bf16 %v358, %v357
      %v382 = vpack.c.bf16 %v360, %v359
      %v383 = vpack.c.bf16 %v362, %v361
      %v384 = vpack.c.bf16 %v364, %v363
      %v385 = vpack.c.bf16 %v366, %v365
      %v386 = vpack.c.bf16 %v368, %v367
      %v387 = vpack.c.bf16 %v370, %v369
      %v388 = vpack.c.bf16 %v372, %v371
      %v390 = vshrl.u32 %v373, 16
      %v392 = vrot.slane %v390, 7
      %v393 = vshll.u32 %v373, 16
      %v395 = vor.u32 %v392, %v393
      %v397 = vshrl.u32 %v374, 16
      %v399 = vrot.slane %v397, 7
      %v400 = vshll.u32 %v374, 16
      %v402 = vor.u32 %v399, %v400
      %v404 = vshrl.u32 %v375, 16
      %v406 = vrot.slane %v404, 7
      %v407 = vshll.u32 %v375, 16
      %v409 = vor.u32 %v406, %v407
      %v411 = vshrl.u32 %v376, 16
      %v413 = vrot.slane %v411, 7
      %v414 = vshll.u32 %v376, 16
      %v416 = vor.u32 %v413, %v414
      %v418 = vshrl.u32 %v377, 16
      %v420 = vrot.slane %v418, 7
      %v421 = vshll.u32 %v377, 16
      %v423 = vor.u32 %v420, %v421
      %v425 = vshrl.u32 %v378, 16
      %v427 = vrot.slane %v425, 7
      %v428 = vshll.u32 %v378, 16
      %v430 = vor.u32 %v427, %v428
      %v432 = vshrl.u32 %v379, 16
      %v434 = vrot.slane %v432, 7
      %v435 = vshll.u32 %v379, 16
      %v437 = vor.u32 %v434, %v435
      %v439 = vshrl.u32 %v380, 16
      %v441 = vrot.slane %v439, 7
      %v442 = vshll.u32 %v380, 16
      %v444 = vor.u32 %v441, %v442
      %v446 = vshrl.u32 %v381, 16
      %v448 = vrot.slane %v446, 7
      %v449 = vshll.u32 %v381, 16
      %v451 = vor.u32 %v448, %v449
      %v453 = vshrl.u32 %v382, 16
      %v455 = vrot.slane %v453, 7
      %v456 = vshll.u32 %v382, 16
      %v458 = vor.u32 %v455, %v456
      %v460 = vshrl.u32 %v383, 16
      %v462 = vrot.slane %v460, 7
      %v463 = vshll.u32 %v383, 16
      %v465 = vor.u32 %v462, %v463
      %v467 = vshrl.u32 %v384, 16
      %v469 = vrot.slane %v467, 7
      %v470 = vshll.u32 %v384, 16
      %v472 = vor.u32 %v469, %v470
      %v474 = vshrl.u32 %v385, 16
      %v476 = vrot.slane %v474, 7
      %v477 = vshll.u32 %v385, 16
      %v479 = vor.u32 %v476, %v477
      %v481 = vshrl.u32 %v386, 16
      %v483 = vrot.slane %v481, 7
      %v484 = vshll.u32 %v386, 16
      %v486 = vor.u32 %v483, %v484
      %v488 = vshrl.u32 %v387, 16
      %v490 = vrot.slane %v488, 7
      %v491 = vshll.u32 %v387, 16
      %v493 = vor.u32 %v490, %v491
      %v495 = vshrl.u32 %v388, 16
      %v497 = vrot.slane %v495, 7
      %v498 = vshll.u32 %v388, 16
      %v500 = vor.u32 %v497, %v498
      %vm533 = vcmask 1040384
      %vm534 = vsmask.f32 256
      %vm535 = vmand %vm533, %vm534
      %v536 = vsel %vm535, 0, %v395
      %v537 = vsel %vm535, 0, %v402
      %v538 = vsel %vm535, 0, %v409
      %v539 = vsel %vm535, 0, %v416
      %v540 = vsel %vm535, 0, %v423
      %v541 = vsel %vm535, 0, %v430
      %v542 = vsel %vm535, 0, %v437
      %v543 = vsel %vm535, 0, %v444
      %v544 = vsel %vm535, 0, %v451
      %v545 = vsel %vm535, 0, %v458
      %v546 = vsel %vm535, 0, %v465
      %v547 = vsel %vm535, 0, %v472
      %v548 = vsel %vm535, 0, %v479
      %v549 = vsel %vm535, 0, %v486
      %v550 = vsel %vm535, 0, %v493
      %v551 = vsel %vm535, 0, %v500
      %v552 = vsel %vm535, %v392, 0
      %v553 = vsel %vm535, %v399, 0
      %v554 = vsel %vm535, %v406, 0
      %v555 = vsel %vm535, %v413, 0
      %v556 = vsel %vm535, %v420, 0
      %v557 = vsel %vm535, %v427, 0
      %v558 = vsel %vm535, %v434, 0
      %v559 = vsel %vm535, %v441, 0
      %v560 = vsel %vm535, %v448, 0
      %v561 = vsel %vm535, %v455, 0
      %v562 = vsel %vm535, %v462, 0
      %v563 = vsel %vm535, %v469, 0
      %v564 = vsel %vm535, %v476, 0
      %v565 = vsel %vm535, %v483, 0
      %v566 = vsel %vm535, %v490, 0
      %v567 = vsel %vm535, %v497, 0
      %vm568 = vsmask.f32 7424
      %v570 = vshrl.u32 %v536, 16
      %v572 = vshll.u32 %v536, 16
      %v574 = vrot.slane %v572, 1
      %v575 = vor.u32 %v570, %v574
      %v577 = vshll.u32 %v552, 16
      %v579 = vrot.slane %v577, 1
      %v580 = vsel %vm568, %v575, %v579
      %v582 = vshrl.u32 %v537, 16
      %v584 = vshll.u32 %v537, 16
      %v586 = vrot.slane %v584, 1
      %v587 = vor.u32 %v582, %v586
      %v589 = vshll.u32 %v553, 16
      %v591 = vrot.slane %v589, 1
      %v592 = vsel %vm568, %v587, %v591
      %v594 = vshrl.u32 %v538, 16
      %v596 = vshll.u32 %v538, 16
      %v598 = vrot.slane %v596, 1
      %v599 = vor.u32 %v594, %v598
      %v601 = vshll.u32 %v554, 16
      %v603 = vrot.slane %v601, 1
      %v604 = vsel %vm568, %v599, %v603
      %v606 = vshrl.u32 %v539, 16
      %v608 = vshll.u32 %v539, 16
      %v610 = vrot.slane %v608, 1
      %v611 = vor.u32 %v606, %v610
      %v613 = vshll.u32 %v555, 16
      %v615 = vrot.slane %v613, 1
      %v616 = vsel %vm568, %v611, %v615
      %v618 = vshrl.u32 %v540, 16
      %v620 = vshll.u32 %v540, 16
      %v622 = vrot.slane %v620, 1
      %v623 = vor.u32 %v618, %v622
      %v625 = vshll.u32 %v556, 16
      %v627 = vrot.slane %v625, 1
      %v628 = vsel %vm568, %v623, %v627
      %v630 = vshrl.u32 %v541, 16
      %v632 = vshll.u32 %v541, 16
      %v634 = vrot.slane %v632, 1
      %v635 = vor.u32 %v630, %v634
      %v637 = vshll.u32 %v557, 16
      %v639 = vrot.slane %v637, 1
      %v640 = vsel %vm568, %v635, %v639
      %v642 = vshrl.u32 %v542, 16
      %v644 = vshll.u32 %v542, 16
      %v646 = vrot.slane %v644, 1
      %v647 = vor.u32 %v642, %v646
      %v649 = vshll.u32 %v558, 16
      %v651 = vrot.slane %v649, 1
      %v652 = vsel %vm568, %v647, %v651
      %v654 = vshrl.u32 %v543, 16
      %v656 = vshll.u32 %v543, 16
      %v658 = vrot.slane %v656, 1
      %v659 = vor.u32 %v654, %v658
      %v661 = vshll.u32 %v559, 16
      %v663 = vrot.slane %v661, 1
      %v664 = vsel %vm568, %v659, %v663
      %v666 = vshrl.u32 %v544, 16
      %v668 = vshll.u32 %v544, 16
      %v670 = vrot.slane %v668, 1
      %v671 = vor.u32 %v666, %v670
      %v673 = vshll.u32 %v560, 16
      %v675 = vrot.slane %v673, 1
      %v676 = vsel %vm568, %v671, %v675
      %v678 = vshrl.u32 %v545, 16
      %v680 = vshll.u32 %v545, 16
      %v682 = vrot.slane %v680, 1
      %v683 = vor.u32 %v678, %v682
      %v685 = vshll.u32 %v561, 16
      %v687 = vrot.slane %v685, 1
      %v688 = vsel %vm568, %v683, %v687
      %v690 = vshrl.u32 %v546, 16
      %v692 = vshll.u32 %v546, 16
      %v694 = vrot.slane %v692, 1
      %v695 = vor.u32 %v690, %v694
      %v697 = vshll.u32 %v562, 16
      %v699 = vrot.slane %v697, 1
      %v700 = vsel %vm568, %v695, %v699
      %v702 = vshrl.u32 %v547, 16
      %v704 = vshll.u32 %v547, 16
      %v706 = vrot.slane %v704, 1
      %v707 = vor.u32 %v702, %v706
      %v709 = vshll.u32 %v563, 16
      %v711 = vrot.slane %v709, 1
      %v712 = vsel %vm568, %v707, %v711
      %v714 = vshrl.u32 %v548, 16
      %v716 = vshll.u32 %v548, 16
      %v718 = vrot.slane %v716, 1
      %v719 = vor.u32 %v714, %v718
      %v721 = vshll.u32 %v564, 16
      %v723 = vrot.slane %v721, 1
      %v724 = vsel %vm568, %v719, %v723
      %v726 = vshrl.u32 %v549, 16
      %v728 = vshll.u32 %v549, 16
      %v730 = vrot.slane %v728, 1
      %v731 = vor.u32 %v726, %v730
      %v733 = vshll.u32 %v565, 16
      %v735 = vrot.slane %v733, 1
      %v736 = vsel %vm568, %v731, %v735
      %v738 = vshrl.u32 %v550, 16
      %v740 = vshll.u32 %v550, 16
      %v742 = vrot.slane %v740, 1
      %v743 = vor.u32 %v738, %v742
      %v745 = vshll.u32 %v566, 16
      %v747 = vrot.slane %v745, 1
      %v748 = vsel %vm568, %v743, %v747
      %v750 = vshrl.u32 %v551, 16
      %v752 = vshll.u32 %v551, 16
      %v754 = vrot.slane %v752, 1
      %v755 = vor.u32 %v750, %v754
      %v757 = vshll.u32 %v567, 16
      %v759 = vrot.slane %v757, 1
      %v760 = vsel %vm568, %v755, %v759
      %761 = vrot.lane.b32.xlu0 %v580, 16
      %v762 = vpop.permute.xlu0 %761
      %763 = vrot.lane.b32.xlu0 %v592, 16
      %v764 = vpop.permute.xlu0 %763
      %765 = vrot.lane.b32.xlu0 %v604, 16
      %v766 = vpop.permute.xlu0 %765
      %767 = vrot.lane.b32.xlu0 %v616, 16
      %v768 = vpop.permute.xlu0 %767
      %769 = vrot.lane.b32.xlu0 %v628, 16
      %v770 = vpop.permute.xlu0 %769
      %771 = vrot.lane.b32.xlu0 %v640, 16
      %v772 = vpop.permute.xlu0 %771
      %773 = vrot.lane.b32.xlu0 %v652, 16
      %v774 = vpop.permute.xlu0 %773
      %775 = vrot.lane.b32.xlu0 %v664, 16
      %v776 = vpop.permute.xlu0 %775
      %777 = vrot.lane.b32.xlu0 %v676, 16
      %v778 = vpop.permute.xlu0 %777
      %779 = vrot.lane.b32.xlu0 %v688, 16
      %v780 = vpop.permute.xlu0 %779
      %781 = vrot.lane.b32.xlu0 %v700, 16
      %v782 = vpop.permute.xlu0 %781
      %783 = vrot.lane.b32.xlu0 %v712, 16
      %v784 = vpop.permute.xlu0 %783
      %785 = vrot.lane.b32.xlu0 %v724, 16
      %v786 = vpop.permute.xlu0 %785
      %787 = vrot.lane.b32.xlu0 %v736, 16
      %v788 = vpop.permute.xlu0 %787
      %789 = vrot.lane.b32.xlu0 %v748, 16
      %v790 = vpop.permute.xlu0 %789
      %791 = vrot.lane.b32.xlu0 %v760, 16
      %v792 = vpop.permute.xlu0 %791
      %vm825 = vcmask 1046528
      %v826 = vrot.slane %v536, 1
      %v827 = vrot.slane %v552, 1
      %v828 = vsel %vm825, %v826, %v827
      %v829 = vrot.slane %v537, 1
      %v830 = vrot.slane %v553, 1
      %v831 = vsel %vm825, %v829, %v830
      %v832 = vrot.slane %v538, 1
      %v833 = vrot.slane %v554, 1
      %v834 = vsel %vm825, %v832, %v833
      %v835 = vrot.slane %v539, 1
      %v836 = vrot.slane %v555, 1
      %v837 = vsel %vm825, %v835, %v836
      %v838 = vrot.slane %v540, 1
      %v839 = vrot.slane %v556, 1
      %v840 = vsel %vm825, %v838, %v839
      %v841 = vrot.slane %v541, 1
      %v842 = vrot.slane %v557, 1
      %v843 = vsel %vm825, %v841, %v842
      %v844 = vrot.slane %v542, 1
      %v845 = vrot.slane %v558, 1
      %v846 = vsel %vm825, %v844, %v845
      %v847 = vrot.slane %v543, 1
      %v848 = vrot.slane %v559, 1
      %v849 = vsel %vm825, %v847, %v848
      %v850 = vrot.slane %v544, 1
      %v851 = vrot.slane %v560, 1
      %v852 = vsel %vm825, %v850, %v851
      %v853 = vrot.slane %v545, 1
      %v854 = vrot.slane %v561, 1
      %v855 = vsel %vm825, %v853, %v854
      %v856 = vrot.slane %v546, 1
      %v857 = vrot.slane %v562, 1
      %v858 = vsel %vm825, %v856, %v857
      %v859 = vrot.slane %v547, 1
      %v860 = vrot.slane %v563, 1
      %v861 = vsel %vm825, %v859, %v860
      %v862 = vrot.slane %v548, 1
      %v863 = vrot.slane %v564, 1
      %v864 = vsel %vm825, %v862, %v863
      %v865 = vrot.slane %v549, 1
      %v866 = vrot.slane %v565, 1
      %v867 = vsel %vm825, %v865, %v866
      %v868 = vrot.slane %v550, 1
      %v869 = vrot.slane %v566, 1
      %v870 = vsel %vm825, %v868, %v869
      %v871 = vrot.slane %v551, 1
      %v872 = vrot.slane %v567, 1
      %v873 = vsel %vm825, %v871, %v872
      %874 = vrot.lane.b32.xlu0 %v828, 32
      %v875 = vpop.permute.xlu0 %874
      %876 = vrot.lane.b32.xlu0 %v831, 32
      %v877 = vpop.permute.xlu0 %876
      %878 = vrot.lane.b32.xlu0 %v834, 32
      %v879 = vpop.permute.xlu0 %878
      %880 = vrot.lane.b32.xlu0 %v837, 32
      %v881 = vpop.permute.xlu0 %880
      %882 = vrot.lane.b32.xlu0 %v840, 32
      %v883 = vpop.permute.xlu0 %882
      %884 = vrot.lane.b32.xlu0 %v843, 32
      %v885 = vpop.permute.xlu0 %884
      %886 = vrot.lane.b32.xlu0 %v846, 32
      %v887 = vpop.permute.xlu0 %886
      %888 = vrot.lane.b32.xlu0 %v849, 32
      %v889 = vpop.permute.xlu0 %888
      %890 = vrot.lane.b32.xlu0 %v852, 32
      %v891 = vpop.permute.xlu0 %890
      %892 = vrot.lane.b32.xlu0 %v855, 32
      %v893 = vpop.permute.xlu0 %892
      %894 = vrot.lane.b32.xlu0 %v858, 32
      %v895 = vpop.permute.xlu0 %894
      %896 = vrot.lane.b32.xlu0 %v861, 32
      %v897 = vpop.permute.xlu0 %896
      %898 = vrot.lane.b32.xlu0 %v864, 32
      %v899 = vpop.permute.xlu0 %898
      %900 = vrot.lane.b32.xlu0 %v867, 32
      %v901 = vpop.permute.xlu0 %900
      %902 = vrot.lane.b32.xlu0 %v870, 32
      %v903 = vpop.permute.xlu0 %902
      %904 = vrot.lane.b32.xlu0 %v873, 32
      %v905 = vpop.permute.xlu0 %904
      %vm906 = vcmask 130048
      %v908 = vsel %vm906, %v536, %v762
      %v910 = vsel %vm906, %v537, %v764
      %v912 = vsel %vm906, %v538, %v766
      %v914 = vsel %vm906, %v539, %v768
      %v916 = vsel %vm906, %v540, %v770
      %v918 = vsel %vm906, %v541, %v772
      %v920 = vsel %vm906, %v542, %v774
      %v922 = vsel %vm906, %v543, %v776
      %v924 = vsel %vm906, %v544, %v778
      %v926 = vsel %vm906, %v545, %v780
      %v928 = vsel %vm906, %v546, %v782
      %v930 = vsel %vm906, %v547, %v784
      %v932 = vsel %vm906, %v548, %v786
      %v934 = vsel %vm906, %v549, %v788
      %v936 = vsel %vm906, %v550, %v790
      %v938 = vsel %vm906, %v551, %v792
      %vm939 = vcmask 261120
      %v941 = vsel %vm939, %v908, %v875
      %v943 = vsel %vm939, %v910, %v877
      %v945 = vsel %vm939, %v912, %v879
      %v947 = vsel %vm939, %v914, %v881
      %v949 = vsel %vm939, %v916, %v883
      %v951 = vsel %vm939, %v918, %v885
      %v953 = vsel %vm939, %v920, %v887
      %v955 = vsel %vm939, %v922, %v889
      %v957 = vsel %vm939, %v924, %v891
      %v959 = vsel %vm939, %v926, %v893
      %v961 = vsel %vm939, %v928, %v895
      %v963 = vsel %vm939, %v930, %v897
      %v965 = vsel %vm939, %v932, %v899
      %v967 = vsel %vm939, %v934, %v901
      %v969 = vsel %vm939, %v936, %v903
      %v971 = vsel %vm939, %v938, %v905
      %v972 = vld [vmem:[%s3] sm:$0xf]
      %v973 = vld [vmem:[%s3 + $0x4] sm:$0xf]
      %v974 = vld [vmem:[%s3 + $0x8] sm:$0xf]
      %v975 = vld [vmem:[%s3 + $0xc] sm:$0xf]
      %v976 = vld [vmem:[%s3 + $0x10] sm:$0xf]
      %v977 = vld [vmem:[%s3 + $0x14] sm:$0xf]
      %s978 = scalar_lea.vmem %s3, 24
      %v979 = vld [vmem:[%s978] sm:$0xf]
      %v980 = vld [vmem:[%s978 + $0x4] sm:$0xf]
      %v981 = vld [vmem:[%s978 + $0x8] sm:$0xf]
      %v982 = vld [vmem:[%s978 + $0xc] sm:$0xf]
      %v983 = vld [vmem:[%s978 + $0x10] sm:$0xf]
      %v984 = vld [vmem:[%s978 + $0x14] sm:$0xf]
      %v991 = vunpack.c.l.b16 %v979
      %v992 = vunpack.c.l.b16 %v980
      %v993 = vunpack.c.l.b16 %v981
      %v994 = vunpack.c.l.b16 %v982
      %v995 = vunpack.c.l.b16 %v983
      %v996 = vunpack.c.l.b16 %v984
      %v997 = vpack.c.b16 %v992, %v991
      %v998 = vpack.c.b16 %v994, %v993
      %v999 = vpack.c.b16 %v996, %v995
      %vm1003 = vcmask 392192
      %v1004 = vsel %vm1003, %v941, 0
      %v1006 = vsel %vm1003, %v943, 0
      %v1008 = vsel %vm1003, %v945, 0
      %v1010 = vsel %vm1003, %v947, 0
      %v1012 = vsel %vm1003, %v949, 0
      %v1014 = vsel %vm1003, %v951, 0
      %v1016 = vsel %vm1003, %v953, 0
      %v1018 = vsel %vm1003, %v955, 0
      %v1020 = vsel %vm1003, %v957, 0
      %v1022 = vsel %vm1003, %v959, 0
      %v1024 = vsel %vm1003, %v961, 0
      %v1026 = vsel %vm1003, %v963, 0
      %v1028 = vsel %vm1003, %v965, 0
      %v1030 = vsel %vm1003, %v967, 0
      %v1032 = vsel %vm1003, %v969, 0
      %v1034 = vsel %vm1003, %v971, 0
      %1036 = vmatprep.subr.bf16.mxu0 0
      %1037 = vmatpush1.bf16.msra.mxu0 0
      %1038 = vmatprep.subr.bf16.mxu0 0
      %1039 = vmatpush1.bf16.msra.mxu0 0
      %1040 = vmatprep.subr.bf16.mxu0 0
      %1041 = vmatpush1.bf16.msra.mxu0 0
      %1042 = vmatprep.subr.bf16.mxu0 0
      %1043 = vmatpush1.bf16.msra.mxu0 0
      %1044 = vmatprep.subr.bf16.mxu0 0
      %1045 = vmatpush1.bf16.msra.mxu0 0
      %1046 = vmatprep.subr.bf16.mxu0 0
      %1047 = vmatpush1.bf16.msra.mxu0 %v999
      %1048 = vmatprep.subr.bf16.mxu0 0
      %1049 = vmatpush1.bf16.msra.mxu0 %v998
      %1050 = vmatprep.subr.bf16.mxu0 0
      %1051 = vmatpush1.bf16.msra.mxu0 %v997
      %1052 = vmatprep.subr.bf16.mxu0 0
      %1053 = vmatpush2.bf16.msra.mxu0 0
      %1054 = vmatprep.subr.bf16.mxu0 0
      %1055 = vmatpush2.bf16.msra.mxu0 0
      %1056 = vmatprep.subr.bf16.mxu0 0
      %1057 = vmatpush2.bf16.msra.mxu0 0
      %1058 = vmatprep.subr.bf16.mxu0 0
      %1059 = vmatpush2.bf16.msra.mxu0 0
      %1060 = vmatprep.subr.bf16.mxu0 0
      %1061 = vmatpush2.bf16.msra.mxu0 0
      %1062 = vmatprep.subr.bf16.mxu0 0
      %1063 = vmatpush2.bf16.msra.mxu0 0
      %1064 = vmatprep.subr.bf16.mxu0 0
      %1065 = vmatpush2.bf16.msra.mxu0 0
      %1066 = vmatprep.subr.bf16.mxu0 0
      %1067 = vmatpush2.bf16.msra.mxu0 0
      %1068 = vmatprep.mubr.bf16.mxu0 0
      %1069 = vmatmul.mubr.bf16.gmra.mxu0 %v1004
      %v1070 = vpop.f32.mrf.mxu0
      %v1071 = vadd.f32 0.0, %v1070
      %v1072 = vpop.f32.mrf.mxu0
      %v1073 = vpop.f32.mrf.mxu0
      %v1074 = vadd.f32 0.0, %v1073
      %v1075 = vpop.f32.mrf.mxu0
      %1076 = vmatprep.mubr.bf16.mxu0 0
      %1077 = vmatmul.mubr.bf16.gmra.mxu0 %v1006
      %v1078 = vpop.f32.mrf.mxu0
      %v1079 = vadd.f32 0.0, %v1078
      %v1080 = vpop.f32.mrf.mxu0
      %v1081 = vpop.f32.mrf.mxu0
      %v1082 = vadd.f32 0.0, %v1081
      %v1083 = vpop.f32.mrf.mxu0
      %1084 = vmatprep.mubr.bf16.mxu0 0
      %1085 = vmatmul.mubr.bf16.gmra.mxu0 %v1008
      %v1086 = vpop.f32.mrf.mxu0
      %v1087 = vadd.f32 0.0, %v1086
      %v1088 = vpop.f32.mrf.mxu0
      %v1089 = vpop.f32.mrf.mxu0
      %v1090 = vadd.f32 0.0, %v1089
      %v1091 = vpop.f32.mrf.mxu0
      %1092 = vmatprep.mubr.bf16.mxu0 0
      %1093 = vmatmul.mubr.bf16.gmra.mxu0 %v1010
      %v1094 = vpop.f32.mrf.mxu0
      %v1095 = vadd.f32 0.0, %v1094
      %v1096 = vpop.f32.mrf.mxu0
      %v1097 = vpop.f32.mrf.mxu0
      %v1098 = vadd.f32 0.0, %v1097
      %v1099 = vpop.f32.mrf.mxu0
      %1100 = vmatprep.mubr.bf16.mxu0 0
      %1101 = vmatmul.mubr.bf16.gmra.mxu0 %v1012
      %v1102 = vpop.f32.mrf.mxu0
      %v1103 = vadd.f32 0.0, %v1102
      %v1104 = vpop.f32.mrf.mxu0
      %v1105 = vpop.f32.mrf.mxu0
      %v1106 = vadd.f32 0.0, %v1105
      %v1107 = vpop.f32.mrf.mxu0
      %1108 = vmatprep.mubr.bf16.mxu0 0
      %1109 = vmatmul.mubr.bf16.gmra.mxu0 %v1014
      %v1110 = vpop.f32.mrf.mxu0
      %v1111 = vadd.f32 0.0, %v1110
      %v1112 = vpop.f32.mrf.mxu0
      %v1113 = vpop.f32.mrf.mxu0
      %v1114 = vadd.f32 0.0, %v1113
      %v1115 = vpop.f32.mrf.mxu0
      %1116 = vmatprep.mubr.bf16.mxu0 0
      %1117 = vmatmul.mubr.bf16.gmra.mxu0 %v1016
      %v1118 = vpop.f32.mrf.mxu0
      %v1119 = vadd.f32 0.0, %v1118
      %v1120 = vpop.f32.mrf.mxu0
      %v1121 = vpop.f32.mrf.mxu0
      %v1122 = vadd.f32 0.0, %v1121
      %v1123 = vpop.f32.mrf.mxu0
      %1124 = vmatprep.mubr.bf16.mxu0 0
      %1125 = vmatmul.mubr.bf16.gmra.mxu0 %v1018
      %v1126 = vpop.f32.mrf.mxu0
      %v1127 = vadd.f32 0.0, %v1126
      %v1128 = vpop.f32.mrf.mxu0
      %v1129 = vpop.f32.mrf.mxu0
      %v1130 = vadd.f32 0.0, %v1129
      %v1131 = vpop.f32.mrf.mxu0
      %1132 = vmatprep.mubr.bf16.mxu0 0
      %1133 = vmatmul.mubr.bf16.gmra.mxu0 %v1020
      %v1134 = vpop.f32.mrf.mxu0
      %v1135 = vadd.f32 0.0, %v1134
      %v1136 = vpop.f32.mrf.mxu0
      %v1137 = vpop.f32.mrf.mxu0
      %v1138 = vadd.f32 0.0, %v1137
      %v1139 = vpop.f32.mrf.mxu0
      %1140 = vmatprep.mubr.bf16.mxu0 0
      %1141 = vmatmul.mubr.bf16.gmra.mxu0 %v1022
      %v1142 = vpop.f32.mrf.mxu0
      %v1143 = vadd.f32 0.0, %v1142
      %v1144 = vpop.f32.mrf.mxu0
      %v1145 = vpop.f32.mrf.mxu0
      %v1146 = vadd.f32 0.0, %v1145
      %v1147 = vpop.f32.mrf.mxu0
      %1148 = vmatprep.mubr.bf16.mxu0 0
      %1149 = vmatmul.mubr.bf16.gmra.mxu0 %v1024
      %v1150 = vpop.f32.mrf.mxu0
      %v1151 = vadd.f32 0.0, %v1150
      %v1152 = vpop.f32.mrf.mxu0
      %v1153 = vpop.f32.mrf.mxu0
      %v1154 = vadd.f32 0.0, %v1153
      %v1155 = vpop.f32.mrf.mxu0
      %1156 = vmatprep.mubr.bf16.mxu0 0
      %1157 = vmatmul.mubr.bf16.gmra.mxu0 %v1026
      %v1158 = vpop.f32.mrf.mxu0
      %v1159 = vadd.f32 0.0, %v1158
      %v1160 = vpop.f32.mrf.mxu0
      %v1161 = vpop.f32.mrf.mxu0
      %v1162 = vadd.f32 0.0, %v1161
      %v1163 = vpop.f32.mrf.mxu0
      %1164 = vmatprep.mubr.bf16.mxu0 0
      %1165 = vmatmul.mubr.bf16.gmra.mxu0 %v1028
      %v1166 = vpop.f32.mrf.mxu0
      %v1167 = vadd.f32 0.0, %v1166
      %v1168 = vpop.f32.mrf.mxu0
      %v1169 = vpop.f32.mrf.mxu0
      %v1170 = vadd.f32 0.0, %v1169
      %v1171 = vpop.f32.mrf.mxu0
      %1172 = vmatprep.mubr.bf16.mxu0 0
      %1173 = vmatmul.mubr.bf16.gmra.mxu0 %v1030
      %v1174 = vpop.f32.mrf.mxu0
      %v1175 = vadd.f32 0.0, %v1174
      %v1176 = vpop.f32.mrf.mxu0
      %v1177 = vpop.f32.mrf.mxu0
      %v1178 = vadd.f32 0.0, %v1177
      %v1179 = vpop.f32.mrf.mxu0
      %1180 = vmatprep.mubr.bf16.mxu0 0
      %1181 = vmatmul.mubr.bf16.gmra.mxu0 %v1032
      %v1182 = vpop.f32.mrf.mxu0
      %v1183 = vadd.f32 0.0, %v1182
      %v1184 = vpop.f32.mrf.mxu0
      %v1185 = vpop.f32.mrf.mxu0
      %v1186 = vadd.f32 0.0, %v1185
      %v1187 = vpop.f32.mrf.mxu0
      %1188 = vmatprep.mubr.bf16.mxu0 0
      %1189 = vmatmul.mubr.bf16.gmra.mxu0 %v1034
      %v1190 = vpop.f32.mrf.mxu0
      %v1191 = vadd.f32 0.0, %v1190
      %v1192 = vpop.f32.mrf.mxu0
      %v1193 = vpop.f32.mrf.mxu0
      %v1194 = vadd.f32 0.0, %v1193
      %v1195 = vpop.f32.mrf.mxu0
      %1196 = vdwg.mxu0
      %v1203 = vunpack.c.l.b16 %v972
      %v1204 = vunpack.c.l.b16 %v973
      %v1205 = vunpack.c.l.b16 %v974
      %v1206 = vunpack.c.l.b16 %v975
      %v1207 = vunpack.c.l.b16 %v976
      %v1208 = vunpack.c.l.b16 %v977
      %v1209 = vpack.c.b16 %v1204, %v1203
      %v1210 = vpack.c.b16 %v1206, %v1205
      %v1211 = vpack.c.b16 %v1208, %v1207
      %v1216 = vsel %vm1003, 0, 0
      %1218 = vmatprep.subr.bf16.mxu0 0
      %1219 = vmatpush1.bf16.msra.mxu0 0
      %1220 = vmatprep.subr.bf16.mxu0 0
      %1221 = vmatpush1.bf16.msra.mxu0 0
      %1222 = vmatprep.subr.bf16.mxu0 0
      %1223 = vmatpush1.bf16.msra.mxu0 0
      %1224 = vmatprep.subr.bf16.mxu0 0
      %1225 = vmatpush1.bf16.msra.mxu0 0
      %1226 = vmatprep.subr.bf16.mxu0 0
      %1227 = vmatpush1.bf16.msra.mxu0 0
      %1228 = vmatprep.subr.bf16.mxu0 0
      %1229 = vmatpush1.bf16.msra.mxu0 %v1211
      %1230 = vmatprep.subr.bf16.mxu0 0
      %1231 = vmatpush1.bf16.msra.mxu0 %v1210
      %1232 = vmatprep.subr.bf16.mxu0 0
      %1233 = vmatpush1.bf16.msra.mxu0 %v1209
      %1234 = vmatprep.subr.bf16.mxu0 0
      %1235 = vmatpush2.bf16.msra.mxu0 0
      %1236 = vmatprep.subr.bf16.mxu0 0
      %1237 = vmatpush2.bf16.msra.mxu0 0
      %1238 = vmatprep.subr.bf16.mxu0 0
      %1239 = vmatpush2.bf16.msra.mxu0 0
      %1240 = vmatprep.subr.bf16.mxu0 0
      %1241 = vmatpush2.bf16.msra.mxu0 0
      %1242 = vmatprep.subr.bf16.mxu0 0
      %1243 = vmatpush2.bf16.msra.mxu0 0
      %1244 = vmatprep.subr.bf16.mxu0 0
      %1245 = vmatpush2.bf16.msra.mxu0 0
      %1246 = vmatprep.subr.bf16.mxu0 0
      %1247 = vmatpush2.bf16.msra.mxu0 0
      %1248 = vmatprep.subr.bf16.mxu0 0
      %1249 = vmatpush2.bf16.msra.mxu0 0
      %1250 = vmatprep.mubr.bf16.mxu0 0
      %1251 = vmatmul.mubr.bf16.gmra.mxu0 %v1216
      %v1252 = vpop.f32.mrf.mxu0
      %v1253 = vadd.f32 %v1071, %v1252
      %v1254 = vpop.f32.mrf.mxu0
      %v1255 = vpop.f32.mrf.mxu0
      %v1256 = vadd.f32 %v1074, %v1255
      %v1257 = vpop.f32.mrf.mxu0
      %1258 = vmatprep.mubr.bf16.mxu0 0
      %1259 = vmatmul.mubr.bf16.gmra.mxu0 %v1004
      %v1260 = vpop.f32.mrf.mxu0
      %v1261 = vadd.f32 %v1079, %v1260
      %v1262 = vpop.f32.mrf.mxu0
      %v1263 = vpop.f32.mrf.mxu0
      %v1264 = vadd.f32 %v1082, %v1263
      %v1265 = vpop.f32.mrf.mxu0
      %1266 = vmatprep.mubr.bf16.mxu0 0
      %1267 = vmatmul.mubr.bf16.gmra.mxu0 %v1006
      %v1268 = vpop.f32.mrf.mxu0
      %v1269 = vadd.f32 %v1087, %v1268
      %v1270 = vpop.f32.mrf.mxu0
      %v1271 = vpop.f32.mrf.mxu0
      %v1272 = vadd.f32 %v1090, %v1271
      %v1273 = vpop.f32.mrf.mxu0
      %1274 = vmatprep.mubr.bf16.mxu0 0
      %1275 = vmatmul.mubr.bf16.gmra.mxu0 %v1008
      %v1276 = vpop.f32.mrf.mxu0
      %v1277 = vadd.f32 %v1095, %v1276
      %v1278 = vpop.f32.mrf.mxu0
      %v1279 = vpop.f32.mrf.mxu0
      %v1280 = vadd.f32 %v1098, %v1279
      %v1281 = vpop.f32.mrf.mxu0
      %1282 = vmatprep.mubr.bf16.mxu0 0
      %1283 = vmatmul.mubr.bf16.gmra.mxu0 %v1010
      %v1284 = vpop.f32.mrf.mxu0
      %v1285 = vadd.f32 %v1103, %v1284
      %v1286 = vpop.f32.mrf.mxu0
      %v1287 = vpop.f32.mrf.mxu0
      %v1288 = vadd.f32 %v1106, %v1287
      %v1289 = vpop.f32.mrf.mxu0
      %1290 = vmatprep.mubr.bf16.mxu0 0
      %1291 = vmatmul.mubr.bf16.gmra.mxu0 %v1012
      %v1292 = vpop.f32.mrf.mxu0
      %v1293 = vadd.f32 %v1111, %v1292
      %v1294 = vpop.f32.mrf.mxu0
      %v1295 = vpop.f32.mrf.mxu0
      %v1296 = vadd.f32 %v1114, %v1295
      %v1297 = vpop.f32.mrf.mxu0
      %1298 = vmatprep.mubr.bf16.mxu0 0
      %1299 = vmatmul.mubr.bf16.gmra.mxu0 %v1014
      %v1300 = vpop.f32.mrf.mxu0
      %v1301 = vadd.f32 %v1119, %v1300
      %v1302 = vpop.f32.mrf.mxu0
      %v1303 = vpop.f32.mrf.mxu0
      %v1304 = vadd.f32 %v1122, %v1303
      %v1305 = vpop.f32.mrf.mxu0
      %1306 = vmatprep.mubr.bf16.mxu0 0
      %1307 = vmatmul.mubr.bf16.gmra.mxu0 %v1016
      %v1308 = vpop.f32.mrf.mxu0
      %v1309 = vadd.f32 %v1127, %v1308
      %v1310 = vpop.f32.mrf.mxu0
      %v1311 = vpop.f32.mrf.mxu0
      %v1312 = vadd.f32 %v1130, %v1311
      %v1313 = vpop.f32.mrf.mxu0
      %1314 = vmatprep.mubr.bf16.mxu0 0
      %1315 = vmatmul.mubr.bf16.gmra.mxu0 %v1018
      %v1316 = vpop.f32.mrf.mxu0
      %v1317 = vadd.f32 %v1135, %v1316
      %v1318 = vpop.f32.mrf.mxu0
      %v1319 = vpop.f32.mrf.mxu0
      %v1320 = vadd.f32 %v1138, %v1319
      %v1321 = vpop.f32.mrf.mxu0
      %1322 = vmatprep.mubr.bf16.mxu0 0
      %1323 = vmatmul.mubr.bf16.gmra.mxu0 %v1020
      %v1324 = vpop.f32.mrf.mxu0
      %v1325 = vadd.f32 %v1143, %v1324
      %v1326 = vpop.f32.mrf.mxu0
      %v1327 = vpop.f32.mrf.mxu0
      %v1328 = vadd.f32 %v1146, %v1327
      %v1329 = vpop.f32.mrf.mxu0
      %1330 = vmatprep.mubr.bf16.mxu0 0
      %1331 = vmatmul.mubr.bf16.gmra.mxu0 %v1022
      %v1332 = vpop.f32.mrf.mxu0
      %v1333 = vadd.f32 %v1151, %v1332
      %v1334 = vpop.f32.mrf.mxu0
      %v1335 = vpop.f32.mrf.mxu0
      %v1336 = vadd.f32 %v1154, %v1335
      %v1337 = vpop.f32.mrf.mxu0
      %1338 = vmatprep.mubr.bf16.mxu0 0
      %1339 = vmatmul.mubr.bf16.gmra.mxu0 %v1024
      %v1340 = vpop.f32.mrf.mxu0
      %v1341 = vadd.f32 %v1159, %v1340
      %v1342 = vpop.f32.mrf.mxu0
      %v1343 = vpop.f32.mrf.mxu0
      %v1344 = vadd.f32 %v1162, %v1343
      %v1345 = vpop.f32.mrf.mxu0
      %1346 = vmatprep.mubr.bf16.mxu0 0
      %1347 = vmatmul.mubr.bf16.gmra.mxu0 %v1026
      %v1348 = vpop.f32.mrf.mxu0
      %v1349 = vadd.f32 %v1167, %v1348
      %v1350 = vpop.f32.mrf.mxu0
      %v1351 = vpop.f32.mrf.mxu0
      %v1352 = vadd.f32 %v1170, %v1351
      %v1353 = vpop.f32.mrf.mxu0
      %1354 = vmatprep.mubr.bf16.mxu0 0
      %1355 = vmatmul.mubr.bf16.gmra.mxu0 %v1028
      %v1356 = vpop.f32.mrf.mxu0
      %v1357 = vadd.f32 %v1175, %v1356
      %v1358 = vpop.f32.mrf.mxu0
      %v1359 = vpop.f32.mrf.mxu0
      %v1360 = vadd.f32 %v1178, %v1359
      %v1361 = vpop.f32.mrf.mxu0
      %1362 = vmatprep.mubr.bf16.mxu0 0
      %1363 = vmatmul.mubr.bf16.gmra.mxu0 %v1030
      %v1364 = vpop.f32.mrf.mxu0
      %v1365 = vadd.f32 %v1183, %v1364
      %v1366 = vpop.f32.mrf.mxu0
      %v1367 = vpop.f32.mrf.mxu0
      %v1368 = vadd.f32 %v1186, %v1367
      %v1369 = vpop.f32.mrf.mxu0
      %1370 = vmatprep.mubr.bf16.mxu0 0
      %1371 = vmatmul.mubr.bf16.gmra.mxu0 %v1032
      %v1372 = vpop.f32.mrf.mxu0
      %v1373 = vadd.f32 %v1191, %v1372
      %v1374 = vpop.f32.mrf.mxu0
      %v1375 = vpop.f32.mrf.mxu0
      %v1376 = vadd.f32 %v1194, %v1375
      %v1377 = vpop.f32.mrf.mxu0
      %1378 = vdwg.mxu0
      %s1379 = scalar_lea.vmem %s3, 48
      %v1380 = vld [vmem:[%s1379] sm:$0xf]
      %v1381 = vld [vmem:[%s1379 + $0x4] sm:$0xf]
      %v1382 = vld [vmem:[%s1379 + $0x8] sm:$0xf]
      %v1383 = vld [vmem:[%s1379 + $0xc] sm:$0xf]
      %v1384 = vld [vmem:[%s1379 + $0x10] sm:$0xf]
      %v1385 = vld [vmem:[%s1379 + $0x14] sm:$0xf]
      %v1392 = vunpack.c.l.b16 %v1380
      %v1393 = vunpack.c.l.b16 %v1381
      %v1394 = vunpack.c.l.b16 %v1382
      %v1395 = vunpack.c.l.b16 %v1383
      %v1396 = vunpack.c.l.b16 %v1384
      %v1397 = vunpack.c.l.b16 %v1385
      %v1398 = vpack.c.b16 %v1393, %v1392
      %v1399 = vpack.c.b16 %v1395, %v1394
      %v1400 = vpack.c.b16 %v1397, %v1396
      %1404 = vmatprep.subr.bf16.mxu0 0
      %1405 = vmatpush1.bf16.msra.mxu0 0
      %1406 = vmatprep.subr.bf16.mxu0 0
      %1407 = vmatpush1.bf16.msra.mxu0 0
      %1408 = vmatprep.subr.bf16.mxu0 0
      %1409 = vmatpush1.bf16.msra.mxu0 0
      %1410 = vmatprep.subr.bf16.mxu0 0
      %1411 = vmatpush1.bf16.msra.mxu0 0
      %1412 = vmatprep.subr.bf16.mxu0 0
      %1413 = vmatpush1.bf16.msra.mxu0 0
      %1414 = vmatprep.subr.bf16.mxu0 0
      %1415 = vmatpush1.bf16.msra.mxu0 %v1400
      %1416 = vmatprep.subr.bf16.mxu0 0
      %1417 = vmatpush1.bf16.msra.mxu0 %v1399
      %1418 = vmatprep.subr.bf16.mxu0 0
      %1419 = vmatpush1.bf16.msra.mxu0 %v1398
      %1420 = vmatprep.subr.bf16.mxu0 0
      %1421 = vmatpush2.bf16.msra.mxu0 0
      %1422 = vmatprep.subr.bf16.mxu0 0
      %1423 = vmatpush2.bf16.msra.mxu0 0
      %1424 = vmatprep.subr.bf16.mxu0 0
      %1425 = vmatpush2.bf16.msra.mxu0 0
      %1426 = vmatprep.subr.bf16.mxu0 0
      %1427 = vmatpush2.bf16.msra.mxu0 0
      %1428 = vmatprep.subr.bf16.mxu0 0
      %1429 = vmatpush2.bf16.msra.mxu0 0
      %1430 = vmatprep.subr.bf16.mxu0 0
      %1431 = vmatpush2.bf16.msra.mxu0 0
      %1432 = vmatprep.subr.bf16.mxu0 0
      %1433 = vmatpush2.bf16.msra.mxu0 0
      %1434 = vmatprep.subr.bf16.mxu0 0
      %1435 = vmatpush2.bf16.msra.mxu0 0
      %1436 = vmatprep.mubr.bf16.mxu0 0
      %1437 = vmatmul.mubr.bf16.gmra.mxu0 %v1006
      %v1438 = vpop.f32.mrf.mxu0
      %v1439 = vadd.f32 0.0, %v1438
      %v1440 = vpop.f32.mrf.mxu0
      %v1441 = vpop.f32.mrf.mxu0
      %v1442 = vadd.f32 0.0, %v1441
      %v1443 = vpop.f32.mrf.mxu0
      %1444 = vmatprep.mubr.bf16.mxu0 0
      %1445 = vmatmul.mubr.bf16.gmra.mxu0 %v1008
      %v1446 = vpop.f32.mrf.mxu0
      %v1447 = vadd.f32 0.0, %v1446
      %v1448 = vpop.f32.mrf.mxu0
      %v1449 = vpop.f32.mrf.mxu0
      %v1450 = vadd.f32 0.0, %v1449
      %v1451 = vpop.f32.mrf.mxu0
      %1452 = vmatprep.mubr.bf16.mxu0 0
      %1453 = vmatmul.mubr.bf16.gmra.mxu0 %v1010
      %v1454 = vpop.f32.mrf.mxu0
      %v1455 = vadd.f32 0.0, %v1454
      %v1456 = vpop.f32.mrf.mxu0
      %v1457 = vpop.f32.mrf.mxu0
      %v1458 = vadd.f32 0.0, %v1457
      %v1459 = vpop.f32.mrf.mxu0
      %1460 = vmatprep.mubr.bf16.mxu0 0
      %1461 = vmatmul.mubr.bf16.gmra.mxu0 %v1012
      %v1462 = vpop.f32.mrf.mxu0
      %v1463 = vadd.f32 0.0, %v1462
      %v1464 = vpop.f32.mrf.mxu0
      %v1465 = vpop.f32.mrf.mxu0
      %v1466 = vadd.f32 0.0, %v1465
      %v1467 = vpop.f32.mrf.mxu0
      %1468 = vmatprep.mubr.bf16.mxu0 0
      %1469 = vmatmul.mubr.bf16.gmra.mxu0 %v1014
      %v1470 = vpop.f32.mrf.mxu0
      %v1471 = vadd.f32 0.0, %v1470
      %v1472 = vpop.f32.mrf.mxu0
      %v1473 = vpop.f32.mrf.mxu0
      %v1474 = vadd.f32 0.0, %v1473
      %v1475 = vpop.f32.mrf.mxu0
      %1476 = vmatprep.mubr.bf16.mxu0 0
      %1477 = vmatmul.mubr.bf16.gmra.mxu0 %v1016
      %v1478 = vpop.f32.mrf.mxu0
      %v1479 = vadd.f32 0.0, %v1478
      %v1480 = vpop.f32.mrf.mxu0
      %v1481 = vpop.f32.mrf.mxu0
      %v1482 = vadd.f32 0.0, %v1481
      %v1483 = vpop.f32.mrf.mxu0
      %1484 = vmatprep.mubr.bf16.mxu0 0
      %1485 = vmatmul.mubr.bf16.gmra.mxu0 %v1018
      %v1486 = vpop.f32.mrf.mxu0
      %v1487 = vadd.f32 0.0, %v1486
      %v1488 = vpop.f32.mrf.mxu0
      %v1489 = vpop.f32.mrf.mxu0
      %v1490 = vadd.f32 0.0, %v1489
      %v1491 = vpop.f32.mrf.mxu0
      %1492 = vmatprep.mubr.bf16.mxu0 0
      %1493 = vmatmul.mubr.bf16.gmra.mxu0 %v1020
      %v1494 = vpop.f32.mrf.mxu0
      %v1495 = vadd.f32 0.0, %v1494
      %v1496 = vpop.f32.mrf.mxu0
      %v1497 = vpop.f32.mrf.mxu0
      %v1498 = vadd.f32 0.0, %v1497
      %v1499 = vpop.f32.mrf.mxu0
      %1500 = vmatprep.mubr.bf16.mxu0 0
      %1501 = vmatmul.mubr.bf16.gmra.mxu0 %v1022
      %v1502 = vpop.f32.mrf.mxu0
      %v1503 = vadd.f32 0.0, %v1502
      %v1504 = vpop.f32.mrf.mxu0
      %v1505 = vpop.f32.mrf.mxu0
      %v1506 = vadd.f32 0.0, %v1505
      %v1507 = vpop.f32.mrf.mxu0
      %1508 = vmatprep.mubr.bf16.mxu0 0
      %1509 = vmatmul.mubr.bf16.gmra.mxu0 %v1024
      %v1510 = vpop.f32.mrf.mxu0
      %v1511 = vadd.f32 0.0, %v1510
      %v1512 = vpop.f32.mrf.mxu0
      %v1513 = vpop.f32.mrf.mxu0
      %v1514 = vadd.f32 0.0, %v1513
      %v1515 = vpop.f32.mrf.mxu0
      %1516 = vmatprep.mubr.bf16.mxu0 0
      %1517 = vmatmul.mubr.bf16.gmra.mxu0 %v1026
      %v1518 = vpop.f32.mrf.mxu0
      %v1519 = vadd.f32 0.0, %v1518
      %v1520 = vpop.f32.mrf.mxu0
      %v1521 = vpop.f32.mrf.mxu0
      %v1522 = vadd.f32 0.0, %v1521
      %v1523 = vpop.f32.mrf.mxu0
      %1524 = vmatprep.mubr.bf16.mxu0 0
      %1525 = vmatmul.mubr.bf16.gmra.mxu0 %v1028
      %v1526 = vpop.f32.mrf.mxu0
      %v1527 = vadd.f32 0.0, %v1526
      %v1528 = vpop.f32.mrf.mxu0
      %v1529 = vpop.f32.mrf.mxu0
      %v1530 = vadd.f32 0.0, %v1529
      %v1531 = vpop.f32.mrf.mxu0
      %1532 = vmatprep.mubr.bf16.mxu0 0
      %1533 = vmatmul.mubr.bf16.gmra.mxu0 %v1030
      %v1534 = vpop.f32.mrf.mxu0
      %v1535 = vadd.f32 0.0, %v1534
      %v1536 = vpop.f32.mrf.mxu0
      %v1537 = vpop.f32.mrf.mxu0
      %v1538 = vadd.f32 0.0, %v1537
      %v1539 = vpop.f32.mrf.mxu0
      %1540 = vmatprep.mubr.bf16.mxu0 0
      %1541 = vmatmul.mubr.bf16.gmra.mxu0 %v1032
      %v1542 = vpop.f32.mrf.mxu0
      %v1543 = vadd.f32 0.0, %v1542
      %v1544 = vpop.f32.mrf.mxu0
      %v1545 = vpop.f32.mrf.mxu0
      %v1546 = vadd.f32 0.0, %v1545
      %v1547 = vpop.f32.mrf.mxu0
      %1548 = vmatprep.mubr.bf16.mxu0 0
      %1549 = vmatmul.mubr.bf16.gmra.mxu0 %v1034
      %v1550 = vpop.f32.mrf.mxu0
      %v1551 = vadd.f32 0.0, %v1550
      %v1552 = vpop.f32.mrf.mxu0
      %v1553 = vpop.f32.mrf.mxu0
      %v1554 = vadd.f32 0.0, %v1553
      %v1555 = vpop.f32.mrf.mxu0
      %1556 = vmatprep.mubr.bf16.mxu0 0
      %1557 = vmatmul.mubr.bf16.gmra.mxu0 %v1216
      %v1558 = vpop.f32.mrf.mxu0
      %v1559 = vadd.f32 0.0, %v1558
      %v1560 = vpop.f32.mrf.mxu0
      %v1561 = vpop.f32.mrf.mxu0
      %v1562 = vadd.f32 0.0, %v1561
      %v1563 = vpop.f32.mrf.mxu0
      %1564 = vdwg.mxu0
      %v1565 = vadd.f32 %v1253, %v1439
      %v1566 = vadd.f32 %v1256, %v1442
      %v1567 = vadd.f32 %v1261, %v1447
      %v1568 = vadd.f32 %v1264, %v1450
      %v1569 = vadd.f32 %v1269, %v1455
      %v1570 = vadd.f32 %v1272, %v1458
      %v1571 = vadd.f32 %v1277, %v1463
      %v1572 = vadd.f32 %v1280, %v1466
      %v1573 = vadd.f32 %v1285, %v1471
      %v1574 = vadd.f32 %v1288, %v1474
      %v1575 = vadd.f32 %v1293, %v1479
      %v1576 = vadd.f32 %v1296, %v1482
      %v1577 = vadd.f32 %v1301, %v1487
      %v1578 = vadd.f32 %v1304, %v1490
      %v1579 = vadd.f32 %v1309, %v1495
      %v1580 = vadd.f32 %v1312, %v1498
      %v1581 = vadd.f32 %v1317, %v1503
      %v1582 = vadd.f32 %v1320, %v1506
      %v1583 = vadd.f32 %v1325, %v1511
      %v1584 = vadd.f32 %v1328, %v1514
      %v1585 = vadd.f32 %v1333, %v1519
      %v1586 = vadd.f32 %v1336, %v1522
      %v1587 = vadd.f32 %v1341, %v1527
      %v1588 = vadd.f32 %v1344, %v1530
      %v1589 = vadd.f32 %v1349, %v1535
      %v1590 = vadd.f32 %v1352, %v1538
      %v1591 = vadd.f32 %v1357, %v1543
      %v1592 = vadd.f32 %v1360, %v1546
      %v1593 = vadd.f32 %v1365, %v1551
      %v1594 = vadd.f32 %v1368, %v1554
      %v1595 = vadd.f32 %v1373, %v1559
      %v1596 = vadd.f32 %v1376, %v1562
      %vm1597 = vcmask 31744
      %1598 = vst.msk [vmem:[%s197] sm:$0xff] %vm1597, %v1565
      %1599 = vst.msk [vmem:[%s197 + $0x8] sm:$0xff] %vm1597, %v1566
      %1600 = vst.msk [vmem:[%s197 + $0x10] sm:$0xff] %vm1597, %v1567
      %1601 = vst.msk [vmem:[%s197 + $0x18] sm:$0xff] %vm1597, %v1568
      %1602 = vst.msk [vmem:[%s197 + $0x20] sm:$0xff] %vm1597, %v1569
      %1603 = vst.msk [vmem:[%s197 + $0x28] sm:$0xff] %vm1597, %v1570
      %1604 = vst.msk [vmem:[%s197 + $0x30] sm:$0xff] %vm1597, %v1571
      %1605 = vst.msk [vmem:[%s197 + $0x38] sm:$0xff] %vm1597, %v1572
      %1606 = vst.msk [vmem:[%s197 + $0x40] sm:$0xff] %vm1597, %v1573
      %1607 = vst.msk [vmem:[%s197 + $0x48] sm:$0xff] %vm1597, %v1574
      %1608 = vst.msk [vmem:[%s197 + $0x50] sm:$0xff] %vm1597, %v1575
      %1609 = vst.msk [vmem:[%s197 + $0x58] sm:$0xff] %vm1597, %v1576
      %1610 = vst.msk [vmem:[%s197 + $0x60] sm:$0xff] %vm1597, %v1577
      %1611 = vst.msk [vmem:[%s197 + $0x68] sm:$0xff] %vm1597, %v1578
      %1612 = vst.msk [vmem:[%s197 + $0x70] sm:$0xff] %vm1597, %v1579
      %1613 = vst.msk [vmem:[%s197 + $0x78] sm:$0xff] %vm1597, %v1580
      %1614 = vst.msk [vmem:[%s197 + $0x80] sm:$0xff] %vm1597, %v1581
      %1615 = vst.msk [vmem:[%s197 + $0x88] sm:$0xff] %vm1597, %v1582
      %1616 = vst.msk [vmem:[%s197 + $0x90] sm:$0xff] %vm1597, %v1583
      %1617 = vst.msk [vmem:[%s197 + $0x98] sm:$0xff] %vm1597, %v1584
      %1618 = vst.msk [vmem:[%s197 + $0xa0] sm:$0xff] %vm1597, %v1585
      %1619 = vst.msk [vmem:[%s197 + $0xa8] sm:$0xff] %vm1597, %v1586
      %1620 = vst.msk [vmem:[%s197 + $0xb0] sm:$0xff] %vm1597, %v1587
      %1621 = vst.msk [vmem:[%s197 + $0xb8] sm:$0xff] %vm1597, %v1588
      %1622 = vst.msk [vmem:[%s197 + $0xc0] sm:$0xff] %vm1597, %v1589
      %1623 = vst.msk [vmem:[%s197 + $0xc8] sm:$0xff] %vm1597, %v1590
      %1624 = vst.msk [vmem:[%s197 + $0xd0] sm:$0xff] %vm1597, %v1591
      %1625 = vst.msk [vmem:[%s197 + $0xd8] sm:$0xff] %vm1597, %v1592
      %1626 = vst.msk [vmem:[%s197 + $0xe0] sm:$0xff] %vm1597, %v1593
      %1627 = vst.msk [vmem:[%s197 + $0xe8] sm:$0xff] %vm1597, %v1594
      %1628 = vst.msk [vmem:[%s197 + $0xf0] sm:$0xff] %vm1597, %v1595
      %1629 = vst.msk [vmem:[%s197 + $0xf8] sm:$0xff] %vm1597, %v1596
      %p1630 = scmp.lt.s32.totalorder %s15, 1
      %s1631 = scalar_select %p1630, %s15, 1
      %s1632 = smul.addr %s1631, 32
      %s1633 = smul.addr %s1632, 8
      %s1634 = scalar_lea.vmem %s4, %s1633
      // Predicated region
      $region37: #{dense_block_pallas.5} parent=35 // pred_check
        %p1635 = pneg %p122
      $region38: #{dense_block_pallas.5} parent=35 // pred_check_branch
        %1637 = sbr.rel (%p1635) target = $region40
      $region39: #{dense_block_pallas.5} parent=35 // pred_region
        _
      $region40: #{dense_block_pallas.5} parent=35 // pred_fallthru
        _
    $region36: #{dense_block_pallas.5} parent=5 // pred_fallthru
      _
    %p1638 = scmp.le.s32.totalorder 2, %s10
    // Predicated region
    $region41: #{dense_block_pallas.5} parent=5 // pred_check
      %p1639 = pneg %p1638
    $region42: #{dense_block_pallas.5} parent=5 // pred_check_branch
      %1641 = sbr.rel (%p1639) target = $region44
    $region43: #{dense_block_pallas.5} parent=5 // pred_region
      %s1642 = ssub.s32 %s10, 2
      // Predicated region
      $region45: #{dense_block_pallas.5} parent=43 // pred_check
        %p1643 = pneg %p128
      $region46: #{dense_block_pallas.5} parent=43 // pred_check_branch
        %1645 = sbr.rel (%p1643) target = $region48
      $region47: #{dense_block_pallas.5} parent=43 // pred_region
        %p1646 = scmp.lt.s32.totalorder %s16, 1
        %s1647 = scalar_select %p1646, %s16, 1
        %s1648 = smul.addr %s1647, 32
        %s1649 = smul.addr %s1648, 8
        %s1650 = scalar_lea.vmem %s4, %s1649
      $region48: #{dense_block_pallas.5} parent=43 // pred_fallthru
        _
    $region44: #{dense_block_pallas.5} parent=5 // pred_fallthru
      _
  $region6: #{dense_block_pallas.5} parent=0 // loop_footer
    %s14 = sadd.s32 1, %s10
  $region7: #{dense_block_pallas.5} parent=0 // loop_footer_branch
    %9 = sbr.rel target = $region3
  $region8: #{dense_block_pallas.5} parent=0 // loop_exit
    _

</llo_original>
